<compile_context>
chip_gen: v5e
topology: v5e:2x2
jax: 0.10.0
libtpu: 0.0.40
codegen_flags: <defaults>
</compile_context>

<pallas_src>
import numpy as np
import jax
import jax.numpy as jnp
from jax.experimental import pallas as pl
from jax.experimental.pallas import tpu as pltpu

ANCESTOR_INDEX = [
    [], [0], [0], [0], [0, 1], [0, 2], [0, 3], [0, 1, 4], [0, 2, 5], [0, 3, 6],
    [0, 1, 4, 7], [0, 2, 5, 8], [0, 3, 6, 9], [0, 3, 6, 9], [0, 3, 6, 9],
    [0, 3, 6, 9, 12], [0, 3, 6, 9, 13], [0, 3, 6, 9, 14],
    [0, 3, 6, 9, 13, 16], [0, 3, 6, 9, 14, 17],
    [0, 3, 6, 9, 13, 16, 18], [0, 3, 6, 9, 14, 17, 19],
    [0, 3, 6, 9, 13, 16, 18, 20], [0, 3, 6, 9, 14, 17, 19, 21],
]
NPOSE = 6                                   # 6D rotation per joint
NJOINT = len(ANCESTOR_INDEX)                # 24
MAXA = max(len(a) for a in ANCESTOR_INDEX)  # 8 (max ancestor-chain length)
NSHAPE = 10
NCAM = 3

POSE_DIM = NJOINT * NPOSE                   # 144
SHAPE_OFF = POSE_DIM                        # 144
CAM_OFF = SHAPE_OFF + NSHAPE                # 154
HEADS_DIM = CAM_OFF + NCAM                  # 157
HEADS_PAD = 256                             # lane-dense padded head width


# ----------------------------------------------------------------------------
# Pallas kernel: one grid step processes a [TB, feat] tile of the batch.
# Four lane-dense matmuls, no concatenates, no narrow outputs.
# ----------------------------------------------------------------------------
def ktd_kernel(x_ref, w1_ref, b1_ref, w2_ref, b2_ref,
               wheads_ref, bheads_ref, tmat_ref, out_ref):
    # fc1 -> (dropout = identity in eval) -> fc2   (bf16 inputs, f32 accumulate)
    h = jnp.dot(x_ref[...], w1_ref[...],
                preferred_element_type=jnp.float32) + b1_ref[...]
    h = jnp.dot(h.astype(jnp.bfloat16), w2_ref[...],
                preferred_element_type=jnp.float32) + b2_ref[...]

    # Fused heads: per-joint h-weights (144) | shape (10) | cam (3) | zero pad.
    acc = jnp.dot(h.astype(jnp.bfloat16), wheads_ref[...],
                  preferred_element_type=jnp.float32) + bheads_ref[...]

    # Kinematic-tree closure: pose = base @ (I - M)^-1, with identity
    # pass-through for the shape/cam columns (tmat kept in f32).
    out_ref[...] = jnp.dot(acc, tmat_ref[...],
                           preferred_element_type=jnp.float32)


# ----------------------------------------------------------------------------
# Wrapper
# ----------------------------------------------------------------------------
def ktd_forward(x, fused, *, tile_b=128):
    nt, feat = x.shape
    hidden = fused["w1"].shape[1]
    assert nt % tile_b == 0, "nt must be a multiple of tile_b"
    grid = (nt // tile_b,)

    def full(shp):
        return pl.BlockSpec(shp, lambda i: tuple(0 for _ in shp))

    in_specs = [
        pl.BlockSpec((tile_b, feat), lambda i: (i, 0)),   # x (bf16)
        full((feat, hidden)),                             # w1 (bf16)
        full((1, hidden)),                                # b1 (f32)
        full((hidden, hidden)),                           # w2 (bf16)
        full((1, hidden)),                                # b2 (f32)
        full((hidden, HEADS_PAD)),                        # wheads (bf16)
        full((1, HEADS_PAD)),                             # bheads (f32)
        full((HEADS_PAD, HEADS_PAD)),                     # tmat (f32)
    ]
    out_specs = pl.BlockSpec((tile_b, HEADS_PAD), lambda i: (i, 0))
    out_shape = jax.ShapeDtypeStruct((nt, HEADS_PAD), jnp.float32)

    # VMEM budget: double-buffered io tiles + weights, with slack.
    def nbytes(a):
        return int(a.size) * a.dtype.itemsize
    w_bytes = sum(nbytes(fused[k]) for k in
                  ("w1", "b1", "w2", "b2", "wheads", "bheads", "tmat"))
    io_bytes = tile_b * feat * 2 + tile_b * HEADS_PAD * 4
    vmem_limit = min(max(2 * (w_bytes + io_bytes) + (8 << 20), 16 << 20), 64 << 20)

    out = pl.pallas_call(
        ktd_kernel,
        out_shape=out_shape,
        grid_spec=pltpu.PrefetchScalarGridSpec(
            num_scalar_prefetch=0,
            grid=grid,
            in_specs=in_specs,
            out_specs=out_specs,
        ),
        compiler_params=pltpu.CompilerParams(
            dimension_semantics=("parallel",),
            vmem_limit_bytes=vmem_limit),
    )(x.astype(jnp.bfloat16),
      fused["w1"], fused["b1"], fused["w2"], fused["b2"],
      fused["wheads"], fused["bheads"], fused["tmat"])

    pred_pose = out[:, :POSE_DIM]
    pred_shape = out[:, SHAPE_OFF:SHAPE_OFF + NSHAPE]
    pred_cam = out[:, CAM_OFF:CAM_OFF + NCAM]
    return pred_pose, pred_shape, pred_cam


# ----------------------------------------------------------------------------
# Deterministic parameter construction (synthetic weights, torch-like inits)
# ----------------------------------------------------------------------------
def _xavier_uniform(key, shape_in_out, gain):
    fan_in, fan_out = shape_in_out
    bound = gain * np.sqrt(6.0 / (fan_in + fan_out))
    return jax.random.uniform(key, (fan_in, fan_out), jnp.float32, -bound, bound)


def make_params(key, feat_dim, hidden_dim):
    """Raw (un-fused) f32 parameters mirroring the torch module layout."""
    keys = jax.random.split(key, 8 + 2 * NJOINT)
    raw = {}
    raw["w1"] = _xavier_uniform(keys[0], (feat_dim, hidden_dim), 1.0)
    raw["b1"] = jax.random.uniform(keys[1], (1, hidden_dim), jnp.float32, -0.01, 0.01)
    raw["w2"] = _xavier_uniform(keys[2], (hidden_dim, hidden_dim), 1.0)
    raw["b2"] = jax.random.uniform(keys[3], (1, hidden_dim), jnp.float32, -0.01, 0.01)
    raw["wsh"] = _xavier_uniform(keys[4], (hidden_dim, NSHAPE), 0.01)
    raw["bsh"] = jax.random.uniform(keys[5], (1, NSHAPE), jnp.float32, -0.01, 0.01)
    raw["wcam"] = _xavier_uniform(keys[6], (hidden_dim, NCAM), 0.01)
    raw["bcam"] = jax.random.uniform(keys[7], (1, NCAM), jnp.float32, -0.01, 0.01)
    raw["wpose"] = []
    raw["bpose"] = []
    for j, anc in enumerate(ANCESTOR_INDEX):
        in_dim = hidden_dim + NPOSE * len(anc)
        raw["wpose"].append(_xavier_uniform(keys[8 + 2 * j], (in_dim, NPOSE), 0.01))
        raw["bpose"].append(jax.random.uniform(keys[9 + 2 * j], (NPOSE,),
                                               jnp.float32, -0.01, 0.01))
    return raw


def pack_params(raw, hidden_dim):
    """Fuse heads and solve the kinematic-tree recurrence on the host."""
    wheads = np.zeros((hidden_dim, HEADS_PAD), np.float32)
    bheads = np.zeros((1, HEADS_PAD), np.float32)
    M = np.zeros((POSE_DIM, POSE_DIM), np.float64)

    for j, anc in enumerate(ANCESTOR_INDEX):
        wj = np.asarray(raw["wpose"][j], np.float64)        # [H + 6*L, 6]
        bj = np.asarray(raw["bpose"][j], np.float64)
        wheads[:, j * NPOSE:(j + 1) * NPOSE] = wj[:hidden_dim].astype(np.float32)
        bheads[0, j * NPOSE:(j + 1) * NPOSE] = bj
        for slot, i in enumerate(anc):
            blk = wj[hidden_dim + slot * NPOSE: hidden_dim + (slot + 1) * NPOSE, :]
            M[i * NPOSE:(i + 1) * NPOSE, j * NPOSE:(j + 1) * NPOSE] = blk

    wheads[:, SHAPE_OFF:SHAPE_OFF + NSHAPE] = np.asarray(raw["wsh"])
    wheads[:, CAM_OFF:CAM_OFF + NCAM] = np.asarray(raw["wcam"])
    bheads[0, SHAPE_OFF:SHAPE_OFF + NSHAPE] = np.asarray(raw["bsh"]).reshape(-1)
    bheads[0, CAM_OFF:CAM_OFF + NCAM] = np.asarray(raw["bcam"]).reshape(-1)

    # pose = base + pose @ M with M strictly block upper-triangular (nilpotent)
    #   =>  pose = base @ (I + M + M^2 + ... + M^MAXA)
    T = np.eye(POSE_DIM)
    P = np.eye(POSE_DIM)
    for _ in range(MAXA):
        P = P @ M
        T = T + P

    tmat = np.zeros((HEADS_PAD, HEADS_PAD), np.float32)
    tmat[:POSE_DIM, :POSE_DIM] = T.astype(np.float32)
    tmat[SHAPE_OFF:HEADS_DIM, SHAPE_OFF:HEADS_DIM] = np.eye(NSHAPE + NCAM,
                                                            dtype=np.float32)

    return {
        "w1": jnp.asarray(raw["w1"]).astype(jnp.bfloat16),
        "b1": jnp.asarray(raw["b1"]),
        "w2": jnp.asarray(raw["w2"]).astype(jnp.bfloat16),
        "b2": jnp.asarray(raw["b2"]),
        "wheads": jnp.asarray(wheads).astype(jnp.bfloat16),
        "bheads": jnp.asarray(bheads),
        "tmat": jnp.asarray(tmat),
    }


# ----------------------------------------------------------------------------
# Pure-JAX reference (mirrors the PyTorch forward, dropout in eval mode)
# ----------------------------------------------------------------------------
def ktd_ref(x, raw):
    h = jnp.dot(x, raw["w1"], precision="highest") + raw["b1"]
    h = jnp.dot(h, raw["w2"], precision="highest") + raw["b2"]
    shape = jnp.dot(h, raw["wsh"], precision="highest") + raw["bsh"]
    cam = jnp.dot(h, raw["wcam"], precision="highest") + raw["bcam"]
    poses = []
    for j, anc in enumerate(ANCESTOR_INDEX):
        inp = jnp.concatenate([h] + [poses[i] for i in anc], axis=1)
        poses.append(jnp.dot(inp, raw["wpose"][j], precision="highest")
                     + raw["bpose"][j])
    return jnp.concatenate(poses, axis=1), shape, cam


if __name__ == "__main__":
    FEAT_DIM = 256      # small stand-in for 2048
    HIDDEN_DIM = 128    # small stand-in for 1024
    NT = 256            # nt = N * seqlen
    TILE_B = 128        # batch tile (MXU-friendly, grid of 2 for megacore)

    key = jax.random.PRNGKey(0)
    kx, kp = jax.random.split(key)
    x = jax.random.normal(kx, (NT, FEAT_DIM), jnp.float32)
    raw = make_params(kp, FEAT_DIM, HIDDEN_DIM)
    fused = pack_params(raw, HIDDEN_DIM)

    pose, shape, cam = jax.block_until_ready(ktd_forward(x, fused, tile_b=TILE_B))

    # sanity check against the pure-JAX reference (original sequential form)
    pose_r, shape_r, cam_r = ktd_ref(x, raw)
    np.testing.assert_allclose(np.asarray(pose), np.asarray(pose_r), atol=5e-3, rtol=5e-3)
    np.testing.assert_allclose(np.asarray(shape), np.asarray(shape_r), atol=5e-3, rtol=5e-3)
    np.testing.assert_allclose(np.asarray(cam), np.asarray(cam_r), atol=5e-3, rtol=5e-3)

    assert pose.shape == (NT, POSE_DIM)   # [nt, 144]
    assert shape.shape == (NT, NSHAPE)    # [nt, 10]
    assert cam.shape == (NT, NCAM)        # [nt, 3]
    print("KERNEL_OK")
</pallas_src>

<mosaic_0001>
module attributes {stable_mosaic.version = 11 : i64} {
  func.func @ktd_kernel(%arg0: i32, %arg1: memref<128x256xbf16, #tpu.memory_space<vmem>>, %arg2: memref<256x128xbf16, #tpu.memory_space<vmem>>, %arg3: memref<1x128xf32, #tpu.memory_space<vmem>>, %arg4: memref<128x128xbf16, #tpu.memory_space<vmem>>, %arg5: memref<1x128xf32, #tpu.memory_space<vmem>>, %arg6: memref<128x256xbf16, #tpu.memory_space<vmem>>, %arg7: memref<1x256xf32, #tpu.memory_space<vmem>>, %arg8: memref<256x256xf32, #tpu.memory_space<vmem>>, %arg9: memref<128x256xf32, #tpu.memory_space<vmem>>) attributes {dimension_semantics = [#tpu.dimension_semantics<parallel>], iteration_bounds = array<i64: 2>, scalar_prefetch = 0 : i64, scratch_operands = 0 : i64, tpu.core_type = #tpu.core_type<tc>, window_params = [{transform_indices = @transform_0, window_bounds = array<i64: 128, 256>}, {pipeline_mode = #tpu.pipeline_mode<synchronous>, transform_indices = @transform_1, window_bounds = array<i64: 256, 128>}, {pipeline_mode = #tpu.pipeline_mode<synchronous>, transform_indices = @transform_2, window_bounds = array<i64: 1, 128>}, {pipeline_mode = #tpu.pipeline_mode<synchronous>, transform_indices = @transform_3, window_bounds = array<i64: 128, 128>}, {pipeline_mode = #tpu.pipeline_mode<synchronous>, transform_indices = @transform_4, window_bounds = array<i64: 1, 128>}, {pipeline_mode = #tpu.pipeline_mode<synchronous>, transform_indices = @transform_5, window_bounds = array<i64: 128, 256>}, {pipeline_mode = #tpu.pipeline_mode<synchronous>, transform_indices = @transform_6, window_bounds = array<i64: 1, 256>}, {pipeline_mode = #tpu.pipeline_mode<synchronous>, transform_indices = @transform_7, window_bounds = array<i64: 256, 256>}, {transform_indices = @transform_8, window_bounds = array<i64: 128, 256>}]} {
    %c0 = arith.constant 0 : index
    %c0_0 = arith.constant 0 : index
    %0 = vector.load %arg1[%c0, %c0_0] : memref<128x256xbf16, #tpu.memory_space<vmem>>, vector<128x256xbf16>
    %c0_1 = arith.constant 0 : index
    %c0_2 = arith.constant 0 : index
    %1 = vector.load %arg2[%c0_1, %c0_2] : memref<256x128xbf16, #tpu.memory_space<vmem>>, vector<256x128xbf16>
    %cst = arith.constant dense<0.000000e+00> : vector<128x128xf32>
    %2 = tpu.matmul %0, %1, %cst {dimension_numbers = #tpu.dot_dimension_numbers<[1], [0], [0], [1], [0, 0, 1, 1], [], []>} : vector<128x256xbf16>, vector<256x128xbf16>, vector<128x128xf32> -> vector<128x128xf32>
    %c0_3 = arith.constant 0 : index
    %c0_4 = arith.constant 0 : index
    %3 = vector.load %arg3[%c0_3, %c0_4] : memref<1x128xf32, #tpu.memory_space<vmem>>, vector<1x128xf32>
    %4 = vector.broadcast %3 : vector<1x128xf32> to vector<128x128xf32>
    %5 = arith.addf %2, %4 : vector<128x128xf32>
    %6 = arith.truncf %5 : vector<128x128xf32> to vector<128x128xbf16>
    %c0_5 = arith.constant 0 : index
    %c0_6 = arith.constant 0 : index
    %7 = vector.load %arg4[%c0_5, %c0_6] : memref<128x128xbf16, #tpu.memory_space<vmem>>, vector<128x128xbf16>
    %cst_7 = arith.constant dense<0.000000e+00> : vector<128x128xf32>
    %8 = tpu.matmul %6, %7, %cst_7 {dimension_numbers = #tpu.dot_dimension_numbers<[1], [0], [0], [1], [0, 0, 1, 1], [], []>} : vector<128x128xbf16>, vector<128x128xbf16>, vector<128x128xf32> -> vector<128x128xf32>
    %c0_8 = arith.constant 0 : index
    %c0_9 = arith.constant 0 : index
    %9 = vector.load %arg5[%c0_8, %c0_9] : memref<1x128xf32, #tpu.memory_space<vmem>>, vector<1x128xf32>
    %10 = vector.broadcast %9 : vector<1x128xf32> to vector<128x128xf32>
    %11 = arith.addf %8, %10 : vector<128x128xf32>
    %12 = arith.truncf %11 : vector<128x128xf32> to vector<128x128xbf16>
    %c0_10 = arith.constant 0 : index
    %c0_11 = arith.constant 0 : index
    %13 = vector.load %arg6[%c0_10, %c0_11] : memref<128x256xbf16, #tpu.memory_space<vmem>>, vector<128x256xbf16>
    %cst_12 = arith.constant dense<0.000000e+00> : vector<128x256xf32>
    %14 = tpu.matmul %12, %13, %cst_12 {dimension_numbers = #tpu.dot_dimension_numbers<[1], [0], [0], [1], [0, 0, 1, 1], [], []>} : vector<128x128xbf16>, vector<128x256xbf16>, vector<128x256xf32> -> vector<128x256xf32>
    %c0_13 = arith.constant 0 : index
    %c0_14 = arith.constant 0 : index
    %15 = vector.load %arg7[%c0_13, %c0_14] : memref<1x256xf32, #tpu.memory_space<vmem>>, vector<1x256xf32>
    %16 = vector.broadcast %15 : vector<1x256xf32> to vector<128x256xf32>
    %17 = arith.addf %14, %16 : vector<128x256xf32>
    %c0_15 = arith.constant 0 : index
    %c0_16 = arith.constant 0 : index
    %18 = vector.load %arg8[%c0_15, %c0_16] : memref<256x256xf32, #tpu.memory_space<vmem>>, vector<256x256xf32>
    %cst_17 = arith.constant dense<0.000000e+00> : vector<128x256xf32>
    %19 = tpu.matmul %17, %18, %cst_17 {dimension_numbers = #tpu.dot_dimension_numbers<[1], [0], [0], [1], [0, 0, 1, 1], [], []>} : vector<128x256xf32>, vector<256x256xf32>, vector<128x256xf32> -> vector<128x256xf32>
    %c0_18 = arith.constant 0 : index
    %c0_19 = arith.constant 0 : index
    %20 = vector.load %arg9[%c0_18, %c0_19] : memref<128x256xf32, #tpu.memory_space<vmem>>, vector<128x256xf32>
    tpu.vector_store %arg9[%c0_18, %c0_19], %19 {strides = array<i32>} : memref<128x256xf32, #tpu.memory_space<vmem>>, vector<128x256xf32>,
    return
  }
  func.func @transform_0(%arg0: i32) -> (i32, i32) {
    %c0_i32 = arith.constant 0 : i32
    %c0_i32_0 = arith.constant 0 : i32
    return %arg0, %c0_i32 : i32, i32
  }
  func.func @transform_1(%arg0: i32) -> (i32, i32) {
    %c0_i32 = arith.constant 0 : i32
    %c0_i32_0 = arith.constant 0 : i32
    %c0_i32_1 = arith.constant 0 : i32
    return %c0_i32, %c0_i32_0 : i32, i32
  }
  func.func @transform_2(%arg0: i32) -> (i32, i32) {
    %c0_i32 = arith.constant 0 : i32
    %c0_i32_0 = arith.constant 0 : i32
    %c0_i32_1 = arith.constant 0 : i32
    return %c0_i32, %c0_i32_0 : i32, i32
  }
  func.func @transform_3(%arg0: i32) -> (i32, i32) {
    %c0_i32 = arith.constant 0 : i32
    %c0_i32_0 = arith.constant 0 : i32
    %c0_i32_1 = arith.constant 0 : i32
    return %c0_i32, %c0_i32_0 : i32, i32
  }
  func.func @transform_4(%arg0: i32) -> (i32, i32) {
    %c0_i32 = arith.constant 0 : i32
    %c0_i32_0 = arith.constant 0 : i32
    %c0_i32_1 = arith.constant 0 : i32
    return %c0_i32, %c0_i32_0 : i32, i32
  }
  func.func @transform_5(%arg0: i32) -> (i32, i32) {
    %c0_i32 = arith.constant 0 : i32
    %c0_i32_0 = arith.constant 0 : i32
    %c0_i32_1 = arith.constant 0 : i32
    return %c0_i32, %c0_i32_0 : i32, i32
  }
  func.func @transform_6(%arg0: i32) -> (i32, i32) {
    %c0_i32 = arith.constant 0 : i32
    %c0_i32_0 = arith.constant 0 : i32
    %c0_i32_1 = arith.constant 0 : i32
    return %c0_i32, %c0_i32_0 : i32, i32
  }
  func.func @transform_7(%arg0: i32) -> (i32, i32) {
    %c0_i32 = arith.constant 0 : i32
    %c0_i32_0 = arith.constant 0 : i32
    %c0_i32_1 = arith.constant 0 : i32
    return %c0_i32, %c0_i32_0 : i32, i32
  }
  func.func @transform_8(%arg0: i32) -> (i32, i32) {
    %c0_i32 = arith.constant 0 : i32
    %c0_i32_0 = arith.constant 0 : i32
    return %arg0, %c0_i32 : i32, i32
  }
}

</mosaic_0001>

<llo_original>
// kernel: tpu_custom_call.1
$region0: #{tpu_custom_call.1}
  #allocation0 [shape = 'u32[]', space=smem, size = 0x4, offset = 0x4, fixed_abs, tag = 'smem constant byte address 0x4 - core index']
  #allocation1 [shape = 'u32[72,128]{1,0:T(1,128)}', space=vmem, size = 0x9000, scoped, tag = 'internal scratch']
  %s0 = inlined_call_operand.hbm [shape: bf16[256,256], index: 0, kind: input, shape index: {}]
  %s1 = inlined_call_operand.hbm [shape: bf16[256,128], index: 1, kind: input, shape index: {}]
  %s2 = inlined_call_operand.vmem [shape: f32[1,128], index: 2, kind: input, shape index: {}]
  %s3 = inlined_call_operand.hbm [shape: bf16[128,128], index: 3, kind: input, shape index: {}]
  %s4 = inlined_call_operand.hbm [shape: f32[1,128], index: 4, kind: input, shape index: {}]
  %s5 = inlined_call_operand.hbm [shape: bf16[128,256], index: 5, kind: input, shape index: {}]
  %s6 = inlined_call_operand.vmem [shape: f32[1,256], index: 6, kind: input, shape index: {}]
  %s7 = inlined_call_operand.hbm [shape: f32[256,256], index: 7, kind: input, shape index: {}]
  %s8 = inlined_call_operand.hbm [shape: f32[256,256], index: 8, kind: output, shape index: {}]
  %s9 = sld [smem:[#allocation0]]
  $region89: #{tpu_custom_call.1} parent=0
    _
  %s11 = ssub.s32 1, %s9
  %s12 = scalar_select 0, %s11, %s9
  $region1: #{tpu_custom_call.1} parent=0
    #allocation2 [shape = 'u8[131072]{0}', space=vmem, size = 0x20000, scoped, tag = 'input window, operand 0']
    #allocation3 [shape = 's32[2]{0}', space=sflag, size = 0x8, scoped, tag = 'scoped memory for tpu_custom_call.1']
    #allocation4 [shape = 's32[2]{0}', space=sflag, size = 0x8, scoped, tag = 'scoped memory for tpu_custom_call.1']
    #allocation5 [shape = 'u8[65536]{0}', space=vmem, size = 0x10000, scoped, tag = 'input window, operand 1, single buffered']
    #allocation6 [shape = 's32[1]{0}', space=sflag, size = 0x4, scoped, tag = 'scoped memory for tpu_custom_call.1']
    #allocation7 [shape = 'u8[32768]{0}', space=vmem, size = 0x8000, scoped, tag = 'input window, operand 3, single buffered']
    #allocation8 [shape = 'u8[512]{0}', space=vmem, size = 0x400, scoped, tag = 'input window, operand 4, single buffered']
    #allocation9 [shape = 's32[1]{0}', space=sflag, size = 0x4, scoped, tag = 'scoped memory for tpu_custom_call.1']
    #allocation10 [shape = 'u8[65536]{0}', space=vmem, size = 0x10000, scoped, tag = 'input window, operand 5, single buffered']
    #allocation11 [shape = 'u8[262144]{0}', space=vmem, size = 0x40000, scoped, tag = 'input window, operand 7, single buffered']
    #allocation12 [shape = 's32[1]{0}', space=sflag, size = 0x4, scoped, tag = 'scoped memory for tpu_custom_call.1']
    #allocation13 [shape = 'u8[262144]{0}', space=vmem, size = 0x40000, scoped, tag = 'output window, operand 0']
    %13 = vsyncpa [#allocation3], 0
    %s14 = scalar_lea.sflag [#allocation3], 1
    %15 = vsyncpa %s14, 0
    %16 = vsyncpa [#allocation6], 0
    %17 = vsyncpa [#allocation9], 0
    %18 = vsyncpa [#allocation12], 0
    %19 = vsyncpa [#allocation4], 0
    %s20 = scalar_lea.sflag [#allocation4], 1
    %21 = vsyncpa %s20, 0
    loop: start=0, step=1, limit=4
    $region2: #{tpu_custom_call.1} parent=1 // loop_pre_header
      _
    $region3: #{tpu_custom_call.1} parent=1 // loop_header
      %s23 = sphi 0, %s27
      %p24 = scmp.ge.s32.totalorder %s23, 4
      %s33 = sphi 0, %s35
      %s36 = sphi 0, %s33
      %s37 = sphi 0, %s36
      %s53 = sphi 0, %s37
      %s57 = sphi 0, %s57
      %s59 = sphi 0, %s57
      %s60 = sphi 0, %s59
      %s74 = sphi 0, %s60
      %s78 = sphi 0, %s78
      %s80 = sphi 0, %s78
      %s81 = sphi 0, %s80
      %s95 = sphi 0, %s81
      %s99 = sphi 0, %s99
      %s101 = sphi 0, %s99
      %s102 = sphi 0, %s101
      %s116 = sphi 0, %s102
      %s120 = sphi 0, %s120
      %s122 = sphi 0, %s120
      %s123 = sphi 0, %s122
      %s137 = sphi 0, %s123
      %s141 = sphi 0, %s141
      %s143 = sphi 0, %s141
      %s144 = sphi 0, %s143
      %s158 = sphi 0, %s144
      %s162 = sphi 0, %s162
      %s164 = sphi 0, %s162
      %s165 = sphi 0, %s164
      %s179 = sphi 0, %s165
      %s183 = sphi 0, %s183
      %s185 = sphi 0, %s183
      %s186 = sphi 0, %s185
      %s200 = sphi 0, %s186
      %s206 = sphi 0, %s208
      %s209 = sphi 0, %s206
      %s210 = sphi 0, %s209
      %s226 = sphi 0, %s210
    $region4: #{tpu_custom_call.1} parent=1 // loop_header_branch
      %26 = sbr.rel (%p24) target = $region8
    $region5: #{tpu_custom_call.1} parent=1 // loop_body
      %s28 = ssub.s32 %s23, 1
      %s29 = ssub.s32 %s23, 2
      %s30 = sadd.s32 %s23, 1
      %s31 = ssub.s32 %s23, %s30
      %p32 = scmp.eq.s32.totalorder %s31, 0
      %s34 = sadd.s32 %s33, 1
      %s35 = scalar_select %p32, %s33, %s34
      %p38 = pneg %p32
      %p39 = scmp.eq.s32.totalorder %s23, 1
      %p40 = por %p38, %p39
      %p41 = scmp.ne.s32.totalorder %s33, %s36
      %p42 = scmp.eq.s32.totalorder %s23, 0
      %p43 = por %p41, %p42
      %p44 = scmp.ne.s32.totalorder %s33, %s36
      %p45 = scmp.eq.s32.totalorder %s28, 1
      %p46 = por %p44, %p45
      %p47 = scmp.ne.s32.totalorder %s36, %s37
      %p48 = scmp.eq.s32.totalorder %s28, 0
      %p49 = por %p47, %p48
      %p50 = scmp.ne.s32.totalorder %s36, %s37
      %p51 = scmp.eq.s32.totalorder %s29, 1
      %p52 = por %p50, %p51
      %p54 = scmp.ne.s32.totalorder %s37, %s53
      %p55 = scmp.eq.s32.totalorder %s29, 0
      %p56 = por %p54, %p55
      %s58 = sadd.s32 %s57, 1
      %p61 = scmp.eq.s32.totalorder %s23, 1
      %p62 = scmp.ne.s32.totalorder %s57, %s59
      %p63 = scmp.eq.s32.totalorder %s23, 0
      %p64 = por %p62, %p63
      %p65 = scmp.ne.s32.totalorder %s57, %s59
      %p66 = scmp.eq.s32.totalorder %s28, 1
      %p67 = por %p65, %p66
      %p68 = scmp.ne.s32.totalorder %s59, %s60
      %p69 = scmp.eq.s32.totalorder %s28, 0
      %p70 = por %p68, %p69
      %p71 = scmp.ne.s32.totalorder %s59, %s60
      %p72 = scmp.eq.s32.totalorder %s29, 1
      %p73 = por %p71, %p72
      %p75 = scmp.ne.s32.totalorder %s60, %s74
      %p76 = scmp.eq.s32.totalorder %s29, 0
      %p77 = por %p75, %p76
      %s79 = sadd.s32 %s78, 1
      %p82 = scmp.eq.s32.totalorder %s23, 1
      %p83 = scmp.ne.s32.totalorder %s78, %s80
      %p84 = scmp.eq.s32.totalorder %s23, 0
      %p85 = por %p83, %p84
      %p86 = scmp.ne.s32.totalorder %s78, %s80
      %p87 = scmp.eq.s32.totalorder %s28, 1
      %p88 = por %p86, %p87
      %p89 = scmp.ne.s32.totalorder %s80, %s81
      %p90 = scmp.eq.s32.totalorder %s28, 0
      %p91 = por %p89, %p90
      %p92 = scmp.ne.s32.totalorder %s80, %s81
      %p93 = scmp.eq.s32.totalorder %s29, 1
      %p94 = por %p92, %p93
      %p96 = scmp.ne.s32.totalorder %s81, %s95
      %p97 = scmp.eq.s32.totalorder %s29, 0
      %p98 = por %p96, %p97
      %s100 = sadd.s32 %s99, 1
      %p103 = scmp.eq.s32.totalorder %s23, 1
      %p104 = scmp.ne.s32.totalorder %s99, %s101
      %p105 = scmp.eq.s32.totalorder %s23, 0
      %p106 = por %p104, %p105
      %p107 = scmp.ne.s32.totalorder %s99, %s101
      %p108 = scmp.eq.s32.totalorder %s28, 1
      %p109 = por %p107, %p108
      %p110 = scmp.ne.s32.totalorder %s101, %s102
      %p111 = scmp.eq.s32.totalorder %s28, 0
      %p112 = por %p110, %p111
      %p113 = scmp.ne.s32.totalorder %s101, %s102
      %p114 = scmp.eq.s32.totalorder %s29, 1
      %p115 = por %p113, %p114
      %p117 = scmp.ne.s32.totalorder %s102, %s116
      %p118 = scmp.eq.s32.totalorder %s29, 0
      %p119 = por %p117, %p118
      %s121 = sadd.s32 %s120, 1
      %p124 = scmp.eq.s32.totalorder %s23, 1
      %p125 = scmp.ne.s32.totalorder %s120, %s122
      %p126 = scmp.eq.s32.totalorder %s23, 0
      %p127 = por %p125, %p126
      %p128 = scmp.ne.s32.totalorder %s120, %s122
      %p129 = scmp.eq.s32.totalorder %s28, 1
      %p130 = por %p128, %p129
      %p131 = scmp.ne.s32.totalorder %s122, %s123
      %p132 = scmp.eq.s32.totalorder %s28, 0
      %p133 = por %p131, %p132
      %p134 = scmp.ne.s32.totalorder %s122, %s123
      %p135 = scmp.eq.s32.totalorder %s29, 1
      %p136 = por %p134, %p135
      %p138 = scmp.ne.s32.totalorder %s123, %s137
      %p139 = scmp.eq.s32.totalorder %s29, 0
      %p140 = por %p138, %p139
      %s142 = sadd.s32 %s141, 1
      %p145 = scmp.eq.s32.totalorder %s23, 1
      %p146 = scmp.ne.s32.totalorder %s141, %s143
      %p147 = scmp.eq.s32.totalorder %s23, 0
      %p148 = por %p146, %p147
      %p149 = scmp.ne.s32.totalorder %s141, %s143
      %p150 = scmp.eq.s32.totalorder %s28, 1
      %p151 = por %p149, %p150
      %p152 = scmp.ne.s32.totalorder %s143, %s144
      %p153 = scmp.eq.s32.totalorder %s28, 0
      %p154 = por %p152, %p153
      %p155 = scmp.ne.s32.totalorder %s143, %s144
      %p156 = scmp.eq.s32.totalorder %s29, 1
      %p157 = por %p155, %p156
      %p159 = scmp.ne.s32.totalorder %s144, %s158
      %p160 = scmp.eq.s32.totalorder %s29, 0
      %p161 = por %p159, %p160
      %s163 = sadd.s32 %s162, 1
      %p166 = scmp.eq.s32.totalorder %s23, 1
      %p167 = scmp.ne.s32.totalorder %s162, %s164
      %p168 = scmp.eq.s32.totalorder %s23, 0
      %p169 = por %p167, %p168
      %p170 = scmp.ne.s32.totalorder %s162, %s164
      %p171 = scmp.eq.s32.totalorder %s28, 1
      %p172 = por %p170, %p171
      %p173 = scmp.ne.s32.totalorder %s164, %s165
      %p174 = scmp.eq.s32.totalorder %s28, 0
      %p175 = por %p173, %p174
      %p176 = scmp.ne.s32.totalorder %s164, %s165
      %p177 = scmp.eq.s32.totalorder %s29, 1
      %p178 = por %p176, %p177
      %p180 = scmp.ne.s32.totalorder %s165, %s179
      %p181 = scmp.eq.s32.totalorder %s29, 0
      %p182 = por %p180, %p181
      %s184 = sadd.s32 %s183, 1
      %p187 = scmp.eq.s32.totalorder %s23, 1
      %p188 = scmp.ne.s32.totalorder %s183, %s185
      %p189 = scmp.eq.s32.totalorder %s23, 0
      %p190 = por %p188, %p189
      %p191 = scmp.ne.s32.totalorder %s183, %s185
      %p192 = scmp.eq.s32.totalorder %s28, 1
      %p193 = por %p191, %p192
      %p194 = scmp.ne.s32.totalorder %s185, %s186
      %p195 = scmp.eq.s32.totalorder %s28, 0
      %p196 = por %p194, %p195
      %p197 = scmp.ne.s32.totalorder %s185, %s186
      %p198 = scmp.eq.s32.totalorder %s29, 1
      %p199 = por %p197, %p198
      %p201 = scmp.ne.s32.totalorder %s186, %s200
      %p202 = scmp.eq.s32.totalorder %s29, 0
      %p203 = por %p201, %p202
      %s204 = ssub.s32 %s23, %s30
      %p205 = scmp.eq.s32.totalorder %s204, 0
      %s207 = sadd.s32 %s206, 1
      %s208 = scalar_select %p205, %s206, %s207
      %p211 = pneg %p205
      %p212 = scmp.eq.s32.totalorder %s23, 1
      %p213 = por %p211, %p212
      %p214 = scmp.ne.s32.totalorder %s206, %s209
      %p215 = scmp.eq.s32.totalorder %s23, 0
      %p216 = por %p214, %p215
      %p217 = scmp.ne.s32.totalorder %s206, %s209
      %p218 = scmp.eq.s32.totalorder %s28, 1
      %p219 = por %p217, %p218
      %p220 = scmp.ne.s32.totalorder %s209, %s210
      %p221 = scmp.eq.s32.totalorder %s28, 0
      %p222 = por %p220, %p221
      %p223 = scmp.ne.s32.totalorder %s209, %s210
      %p224 = scmp.eq.s32.totalorder %s29, 1
      %p225 = por %p223, %p224
      %p227 = scmp.ne.s32.totalorder %s210, %s226
      %p228 = scmp.eq.s32.totalorder %s29, 0
      %p229 = por %p227, %p228
      %p230 = scmp.le.s32.totalorder 1, %s23
      %p231 = scmp.lt.s32.totalorder %s23, 3
      %p232 = pnand %p230, %p231
      %p233 = pneg %p232
      // Predicated region
      $region9: #{tpu_custom_call.1} parent=5 // pred_check
        _
      $region10: #{tpu_custom_call.1} parent=5 // pred_check_branch
        %235 = sbr.rel (%p232) target = $region12
      $region11: #{tpu_custom_call.1} parent=5 // pred_region
        %s236 = ssub.s32 %s23, 1
        // Predicated region
        $region13: #{tpu_custom_call.1} parent=11 // pred_check
          %p237 = pneg %p70
        $region14: #{tpu_custom_call.1} parent=11 // pred_check_branch
          %239 = sbr.rel (%p237) target = $region16
        $region15: #{tpu_custom_call.1} parent=11 // pred_region
          %241 = vsyncadd [#allocation6], 0
          %s242 = sshll.u32 %s1, 4
          %s243 = int_to_ptr.hbm [resolvable:$true] %s242
          %s244 = sshll.u32 [#allocation5], 4
          %s245 = int_to_ptr.vmem [resolvable:$true] %s244
          %250 = dma.hbm_to_vmem [thread:$0]  %s243, 2048, %s245, [#allocation6], 64, 64, 4
        $region16: #{tpu_custom_call.1} parent=11 // pred_fallthru
          _
        // Predicated region
        $region17: #{tpu_custom_call.1} parent=11 // pred_check
          %p251 = pneg %p91
        $region18: #{tpu_custom_call.1} parent=11 // pred_check_branch
          %253 = sbr.rel (%p251) target = $region20
        $region19: #{tpu_custom_call.1} parent=11 // pred_region
          _
        $region20: #{tpu_custom_call.1} parent=11 // pred_fallthru
          _
        // Predicated region
        $region21: #{tpu_custom_call.1} parent=11 // pred_check
          %p254 = pneg %p112
        $region22: #{tpu_custom_call.1} parent=11 // pred_check_branch
          %256 = sbr.rel (%p254) target = $region24
        $region23: #{tpu_custom_call.1} parent=11 // pred_region
          %258 = vsyncadd [#allocation6], 0
          %s259 = sshll.u32 %s3, 4
          %s260 = int_to_ptr.hbm [resolvable:$true] %s259
          %s261 = sshll.u32 [#allocation7], 4
          %s262 = int_to_ptr.vmem [resolvable:$true] %s261
          %267 = dma.hbm_to_vmem [thread:$0]  %s260, 1024, %s262, [#allocation6], 64, 64, 4
        $region24: #{tpu_custom_call.1} parent=11 // pred_fallthru
          _
        // Predicated region
        $region25: #{tpu_custom_call.1} parent=11 // pred_check
          %p268 = pneg %p133
        $region26: #{tpu_custom_call.1} parent=11 // pred_check_branch
          %270 = sbr.rel (%p268) target = $region28
        $region27: #{tpu_custom_call.1} parent=11 // pred_region
          %272 = vsyncadd [#allocation9], 0
          %s274 = sshll.u32 %s4, 4
          %s275 = int_to_ptr.hbm [resolvable:$true] %s274
          %s276 = sshll.u32 [#allocation8], 4
          %s277 = int_to_ptr.vmem [resolvable:$true] %s276
          %279 = dma.hbm_to_vmem [thread:$0]  %s275, 16, %s277, [#allocation9]
        $region28: #{tpu_custom_call.1} parent=11 // pred_fallthru
          _
        // Predicated region
        $region29: #{tpu_custom_call.1} parent=11 // pred_check
          %p280 = pneg %p154
        $region30: #{tpu_custom_call.1} parent=11 // pred_check_branch
          %282 = sbr.rel (%p280) target = $region32
        $region31: #{tpu_custom_call.1} parent=11 // pred_region
          %284 = vsyncadd [#allocation9], 0
          %s285 = sshll.u32 %s5, 4
          %s286 = int_to_ptr.hbm [resolvable:$true] %s285
          %s287 = sshll.u32 [#allocation10], 4
          %s288 = int_to_ptr.vmem [resolvable:$true] %s287
          %293 = dma.hbm_to_vmem [thread:$0]  %s286, 2048, %s288, [#allocation9], 128, 128, 8
        $region32: #{tpu_custom_call.1} parent=11 // pred_fallthru
          _
        // Predicated region
        $region33: #{tpu_custom_call.1} parent=11 // pred_check
          %p294 = pneg %p175
        $region34: #{tpu_custom_call.1} parent=11 // pred_check_branch
          %296 = sbr.rel (%p294) target = $region36
        $region35: #{tpu_custom_call.1} parent=11 // pred_region
          _
        $region36: #{tpu_custom_call.1} parent=11 // pred_fallthru
          _
        // Predicated region
        $region37: #{tpu_custom_call.1} parent=11 // pred_check
          %p297 = pneg %p196
        $region38: #{tpu_custom_call.1} parent=11 // pred_check_branch
          %299 = sbr.rel (%p297) target = $region40
        $region39: #{tpu_custom_call.1} parent=11 // pred_region
          %301 = vsyncadd [#allocation12], 0
          %s302 = sshll.u32 %s7, 4
          %s303 = int_to_ptr.hbm [resolvable:$true] %s302
          %s304 = sshll.u32 [#allocation11], 4
          %s305 = int_to_ptr.vmem [resolvable:$true] %s304
          %310 = dma.hbm_to_vmem [thread:$0]  %s303, 8192, %s305, [#allocation12], 256, 256, 16
        $region40: #{tpu_custom_call.1} parent=11 // pred_fallthru
          _
      $region12: #{tpu_custom_call.1} parent=5 // pred_fallthru
        _
      %p311 = scmp.lt.s32.totalorder %s23, 2
      // Predicated region
      $region41: #{tpu_custom_call.1} parent=5 // pred_check
        %p312 = pneg %p311
      $region42: #{tpu_custom_call.1} parent=5 // pred_check_branch
        %314 = sbr.rel (%p312) target = $region44
      $region43: #{tpu_custom_call.1} parent=5 // pred_region
        // Predicated region
        $region45: #{tpu_custom_call.1} parent=43 // pred_check
          %p315 = pneg %p43
        $region46: #{tpu_custom_call.1} parent=43 // pred_check_branch
          %317 = sbr.rel (%p315) target = $region48
        $region47: #{tpu_custom_call.1} parent=43 // pred_region
          %s318 = sand.u32 %s33, 1
          %s319 = scalar_lea.sflag [#allocation3], %s318
          %s320 = sand.u32 %s33, 1
          %s321 = smul.addr %s320, 128
          %s322 = scalar_lea.vmem [#allocation2], %s321
          %s323 = smul.u32 16, %s23
          %325 = vsyncadd %s319, 0
          %s326 = smul.addr %s323, 2
          %s327 = smul.addr %s326, 4
          %s328 = scalar_lea.hbm %s0, %s327
          %s329 = sshll.u32 %s328, 4
          %s330 = int_to_ptr.hbm [resolvable:$true] %s329
          %s331 = sshll.u32 %s322, 4
          %s332 = int_to_ptr.vmem [resolvable:$true] %s331
          %337 = dma.hbm_to_vmem [thread:$0]  %s330, 2048, %s332, %s319, 128, 128, 8
        $region48: #{tpu_custom_call.1} parent=43 // pred_fallthru
          _
      $region44: #{tpu_custom_call.1} parent=5 // pred_fallthru
        _
      %p338 = scmp.le.s32.totalorder 1, %s23
      %p339 = scmp.lt.s32.totalorder %s23, 3
      %p340 = pnand %p338, %p339
      %p341 = pneg %p340
      // Predicated region
      $region49: #{tpu_custom_call.1} parent=5 // pred_check
        _
      $region50: #{tpu_custom_call.1} parent=5 // pred_check_branch
        %343 = sbr.rel (%p340) target = $region52
      $region51: #{tpu_custom_call.1} parent=5 // pred_region
        %s344 = ssub.s32 %s23, 1
        %s345 = sand.u32 %s36, 1
        %s346 = scalar_lea.sflag [#allocation3], %s345
        %s347 = sand.u32 %s36, 1
        %s348 = smul.addr %s347, 128
        %s349 = scalar_lea.vmem [#allocation2], %s348
        // Predicated region
        $region53: #{tpu_custom_call.1} parent=51 // pred_check
          %p350 = pneg %p49
        $region54: #{tpu_custom_call.1} parent=51 // pred_check_branch
          %352 = sbr.rel (%p350) target = $region56
        $region55: #{tpu_custom_call.1} parent=51 // pred_region
          %354 = dma.done %s346, 2048
        $region56: #{tpu_custom_call.1} parent=51 // pred_fallthru
          _
        // Predicated region
        $region57: #{tpu_custom_call.1} parent=51 // pred_check
          %p355 = pneg %p70
        $region58: #{tpu_custom_call.1} parent=51 // pred_check_branch
          %357 = sbr.rel (%p355) target = $region60
        $region59: #{tpu_custom_call.1} parent=51 // pred_region
          %359 = dma.done [#allocation6], 2048
        $region60: #{tpu_custom_call.1} parent=51 // pred_fallthru
          _
        // Predicated region
        $region61: #{tpu_custom_call.1} parent=51 // pred_check
          %p360 = pneg %p112
        $region62: #{tpu_custom_call.1} parent=51 // pred_check_branch
          %362 = sbr.rel (%p360) target = $region64
        $region63: #{tpu_custom_call.1} parent=51 // pred_region
          %364 = dma.done [#allocation6], 1024
        $region64: #{tpu_custom_call.1} parent=51 // pred_fallthru
          _
        // Predicated region
        $region65: #{tpu_custom_call.1} parent=51 // pred_check
          %p365 = pneg %p133
        $region66: #{tpu_custom_call.1} parent=51 // pred_check_branch
          %367 = sbr.rel (%p365) target = $region68
        $region67: #{tpu_custom_call.1} parent=51 // pred_region
          %369 = dma.done [#allocation9], 16
        $region68: #{tpu_custom_call.1} parent=51 // pred_fallthru
          _
        // Predicated region
        $region69: #{tpu_custom_call.1} parent=51 // pred_check
          %p370 = pneg %p154
        $region70: #{tpu_custom_call.1} parent=51 // pred_check_branch
          %372 = sbr.rel (%p370) target = $region72
        $region71: #{tpu_custom_call.1} parent=51 // pred_region
          %374 = dma.done [#allocation9], 2048
        $region72: #{tpu_custom_call.1} parent=51 // pred_fallthru
          _
        // Predicated region
        $region73: #{tpu_custom_call.1} parent=51 // pred_check
          %p375 = pneg %p196
        $region74: #{tpu_custom_call.1} parent=51 // pred_check_branch
          %377 = sbr.rel (%p375) target = $region76
        $region75: #{tpu_custom_call.1} parent=51 // pred_region
          %379 = dma.done [#allocation12], 8192
        $region76: #{tpu_custom_call.1} parent=51 // pred_fallthru
          _
        %s380 = sand.u32 %s36, 1
        %s381 = scalar_lea.sflag [#allocation3], %s380
        %s382 = sand.u32 %s36, 1
        %s383 = smul.addr %s382, 128
        %s384 = scalar_lea.vmem [#allocation2], %s383
        %p385 = pneg %p49
        %p386 = pneg %p46
        %p387 = pneg %p70
        %p388 = pneg %p67
        %p389 = pneg %p91
        %p390 = pneg %p88
        %p391 = pneg %p112
        %p392 = pneg %p109
        %p393 = pneg %p133
        %p394 = pneg %p130
        %p395 = pneg %p154
        %p396 = pneg %p151
        %p397 = pneg %p175
        %p398 = pneg %p172
        %p399 = pneg %p196
        %p400 = pneg %p193
        %p401 = pneg %p222
        %p402 = pneg %p219
        %s403 = sand.u32 %s209, 1
        %s404 = scalar_lea.sflag [#allocation4], %s403
        %s405 = sand.u32 %s209, 1
        %s406 = smul.addr %s405, 256
        %s407 = scalar_lea.vmem [#allocation13], %s406
        %s408 = smul.u32 16, %s28
        %s409 = smul.u32 16, %s28
        %v410 = vld [vmem:[%s349] sm:$0xff]
        %v411 = vld [vmem:[%s349 + $0x8] sm:$0xff]
        %v412 = vld [vmem:[%s349 + $0x10] sm:$0xff]
        %v413 = vld [vmem:[%s349 + $0x18] sm:$0xff]
        %v414 = vld [vmem:[%s349 + $0x20] sm:$0xff]
        %v415 = vld [vmem:[%s349 + $0x28] sm:$0xff]
        %v416 = vld [vmem:[%s349 + $0x30] sm:$0xff]
        %v417 = vld [vmem:[%s349 + $0x38] sm:$0xff]
        %v418 = vld [vmem:[%s349 + $0x40] sm:$0xff]
        %v419 = vld [vmem:[%s349 + $0x48] sm:$0xff]
        %v420 = vld [vmem:[%s349 + $0x50] sm:$0xff]
        %v421 = vld [vmem:[%s349 + $0x58] sm:$0xff]
        %v422 = vld [vmem:[%s349 + $0x60] sm:$0xff]
        %v423 = vld [vmem:[%s349 + $0x68] sm:$0xff]
        %v424 = vld [vmem:[%s349 + $0x70] sm:$0xff]
        %v425 = vld [vmem:[%s349 + $0x78] sm:$0xff]
        %v426 = vld [vmem:[#allocation5] sm:$0xf]
        %v427 = vld [vmem:[#allocation5 + $0x4] sm:$0xf]
        %v428 = vld [vmem:[#allocation5 + $0x8] sm:$0xf]
        %v429 = vld [vmem:[#allocation5 + $0xc] sm:$0xf]
        %v430 = vld [vmem:[#allocation5 + $0x10] sm:$0xf]
        %v431 = vld [vmem:[#allocation5 + $0x14] sm:$0xf]
        %v432 = vld [vmem:[#allocation5 + $0x18] sm:$0xf]
        %v433 = vld [vmem:[#allocation5 + $0x1c] sm:$0xf]
        %v434 = vld [vmem:[#allocation5 + $0x20] sm:$0xf]
        %v435 = vld [vmem:[#allocation5 + $0x24] sm:$0xf]
        %v436 = vld [vmem:[#allocation5 + $0x28] sm:$0xf]
        %v437 = vld [vmem:[#allocation5 + $0x2c] sm:$0xf]
        %v438 = vld [vmem:[#allocation5 + $0x30] sm:$0xf]
        %v439 = vld [vmem:[#allocation5 + $0x34] sm:$0xf]
        %v440 = vld [vmem:[#allocation5 + $0x38] sm:$0xf]
        %v441 = vld [vmem:[#allocation5 + $0x3c] sm:$0xf]
        %v442 = vld [vmem:[#allocation5 + $0x40] sm:$0xf]
        %v443 = vld [vmem:[#allocation5 + $0x44] sm:$0xf]
        %v444 = vld [vmem:[#allocation5 + $0x48] sm:$0xf]
        %v445 = vld [vmem:[#allocation5 + $0x4c] sm:$0xf]
        %v446 = vld [vmem:[#allocation5 + $0x50] sm:$0xf]
        %v447 = vld [vmem:[#allocation5 + $0x54] sm:$0xf]
        %v448 = vld [vmem:[#allocation5 + $0x58] sm:$0xf]
        %v449 = vld [vmem:[#allocation5 + $0x5c] sm:$0xf]
        %v450 = vld [vmem:[#allocation5 + $0x60] sm:$0xf]
        %v451 = vld [vmem:[#allocation5 + $0x64] sm:$0xf]
        %v452 = vld [vmem:[#allocation5 + $0x68] sm:$0xf]
        %v453 = vld [vmem:[#allocation5 + $0x6c] sm:$0xf]
        %v454 = vld [vmem:[#allocation5 + $0x70] sm:$0xf]
        %v455 = vld [vmem:[#allocation5 + $0x74] sm:$0xf]
        %v456 = vld [vmem:[#allocation5 + $0x78] sm:$0xf]
        %v457 = vld [vmem:[#allocation5 + $0x7c] sm:$0xf]
        %v458 = vld [vmem:[%s2] sm:$0x1]
        %v460 = vperm.slane %v458, 0
        %v478 = vunpack.c.l.b16 %v410
        %v479 = vunpack.c.h.b16 %v410
        %v480 = vunpack.c.l.b16 %v411
        %v481 = vunpack.c.h.b16 %v411
        %v482 = vunpack.c.l.b16 %v412
        %v483 = vunpack.c.h.b16 %v412
        %v484 = vunpack.c.l.b16 %v413
        %v485 = vunpack.c.h.b16 %v413
        %v486 = vunpack.c.l.b16 %v414
        %v487 = vunpack.c.h.b16 %v414
        %v488 = vunpack.c.l.b16 %v415
        %v489 = vunpack.c.h.b16 %v415
        %v490 = vunpack.c.l.b16 %v416
        %v491 = vunpack.c.h.b16 %v416
        %v492 = vunpack.c.l.b16 %v417
        %v493 = vunpack.c.h.b16 %v417
        %v494 = vunpack.c.l.b16 %v418
        %v495 = vunpack.c.h.b16 %v418
        %v496 = vunpack.c.l.b16 %v419
        %v497 = vunpack.c.h.b16 %v419
        %v498 = vunpack.c.l.b16 %v420
        %v499 = vunpack.c.h.b16 %v420
        %v500 = vunpack.c.l.b16 %v421
        %v501 = vunpack.c.h.b16 %v421
        %v502 = vunpack.c.l.b16 %v422
        %v503 = vunpack.c.h.b16 %v422
        %v504 = vunpack.c.l.b16 %v423
        %v505 = vunpack.c.h.b16 %v423
        %v506 = vunpack.c.l.b16 %v424
        %v507 = vunpack.c.h.b16 %v424
        %v508 = vunpack.c.l.b16 %v425
        %v509 = vunpack.c.h.b16 %v425
        %v510 = vpack.c.b16 %v480, %v478
        %v511 = vpack.c.b16 %v481, %v479
        %v512 = vpack.c.b16 %v484, %v482
        %v513 = vpack.c.b16 %v485, %v483
        %v514 = vpack.c.b16 %v488, %v486
        %v515 = vpack.c.b16 %v489, %v487
        %v516 = vpack.c.b16 %v492, %v490
        %v517 = vpack.c.b16 %v493, %v491
        %v518 = vpack.c.b16 %v496, %v494
        %v519 = vpack.c.b16 %v497, %v495
        %v520 = vpack.c.b16 %v500, %v498
        %v521 = vpack.c.b16 %v501, %v499
        %v522 = vpack.c.b16 %v504, %v502
        %v523 = vpack.c.b16 %v505, %v503
        %v524 = vpack.c.b16 %v508, %v506
        %v525 = vpack.c.b16 %v509, %v507
        %v574 = vunpack.c.l.b16 %v426
        %v575 = vunpack.c.l.b16 %v427
        %v576 = vunpack.c.l.b16 %v428
        %v577 = vunpack.c.l.b16 %v429
        %v578 = vunpack.c.l.b16 %v430
        %v579 = vunpack.c.l.b16 %v431
        %v580 = vunpack.c.l.b16 %v432
        %v581 = vunpack.c.l.b16 %v433
        %v582 = vunpack.c.l.b16 %v434
        %v583 = vunpack.c.l.b16 %v435
        %v584 = vunpack.c.l.b16 %v436
        %v585 = vunpack.c.l.b16 %v437
        %v586 = vunpack.c.l.b16 %v438
        %v587 = vunpack.c.l.b16 %v439
        %v588 = vunpack.c.l.b16 %v440
        %v589 = vunpack.c.l.b16 %v441
        %v590 = vunpack.c.l.b16 %v442
        %v591 = vunpack.c.l.b16 %v443
        %v592 = vunpack.c.l.b16 %v444
        %v593 = vunpack.c.l.b16 %v445
        %v594 = vunpack.c.l.b16 %v446
        %v595 = vunpack.c.l.b16 %v447
        %v596 = vunpack.c.l.b16 %v448
        %v597 = vunpack.c.l.b16 %v449
        %v598 = vunpack.c.l.b16 %v450
        %v599 = vunpack.c.l.b16 %v451
        %v600 = vunpack.c.l.b16 %v452
        %v601 = vunpack.c.l.b16 %v453
        %v602 = vunpack.c.l.b16 %v454
        %v603 = vunpack.c.l.b16 %v455
        %v604 = vunpack.c.l.b16 %v456
        %v605 = vunpack.c.l.b16 %v457
        %v606 = vpack.c.b16 %v575, %v574
        %v607 = vpack.c.b16 %v577, %v576
        %v608 = vpack.c.b16 %v579, %v578
        %v609 = vpack.c.b16 %v581, %v580
        %v610 = vpack.c.b16 %v583, %v582
        %v611 = vpack.c.b16 %v585, %v584
        %v612 = vpack.c.b16 %v587, %v586
        %v613 = vpack.c.b16 %v589, %v588
        %v614 = vpack.c.b16 %v591, %v590
        %v615 = vpack.c.b16 %v593, %v592
        %v616 = vpack.c.b16 %v595, %v594
        %v617 = vpack.c.b16 %v597, %v596
        %v618 = vpack.c.b16 %v599, %v598
        %v619 = vpack.c.b16 %v601, %v600
        %v620 = vpack.c.b16 %v603, %v602
        %v621 = vpack.c.b16 %v605, %v604
        %638 = vmatpush.bf16.msra.mxu0 %v613
        %639 = vmatpush.bf16.msra.mxu0 %v612
        %640 = vmatpush.bf16.msra.mxu0 %v611
        %641 = vmatpush.bf16.msra.mxu0 %v610
        %642 = vmatpush.bf16.msra.mxu0 %v609
        %643 = vmatpush.bf16.msra.mxu0 %v608
        %644 = vmatpush.bf16.msra.mxu0 %v607
        %645 = vmatpush.bf16.msra.mxu0 %v606
        %646 = vmatmul.bf16.gmra.mxu0 %v510
        %v647 = vpop.f32.mrf.mxu0
        %v648 = vadd.f32 %v460, %v647
        %v649 = vpop.f32.mrf.mxu0
        %v650 = vadd.f32 %v460, %v649
        %651 = vmatmul.bf16.gmra.mxu0 %v512
        %v652 = vpop.f32.mrf.mxu0
        %v653 = vadd.f32 %v460, %v652
        %v654 = vpop.f32.mrf.mxu0
        %v655 = vadd.f32 %v460, %v654
        %656 = vmatmul.bf16.gmra.mxu0 %v514
        %v657 = vpop.f32.mrf.mxu0
        %v658 = vadd.f32 %v460, %v657
        %v659 = vpop.f32.mrf.mxu0
        %v660 = vadd.f32 %v460, %v659
        %661 = vmatmul.bf16.gmra.mxu0 %v516
        %v662 = vpop.f32.mrf.mxu0
        %v663 = vadd.f32 %v460, %v662
        %v664 = vpop.f32.mrf.mxu0
        %v665 = vadd.f32 %v460, %v664
        %666 = vmatmul.bf16.gmra.mxu0 %v518
        %v667 = vpop.f32.mrf.mxu0
        %v668 = vadd.f32 %v460, %v667
        %v669 = vpop.f32.mrf.mxu0
        %v670 = vadd.f32 %v460, %v669
        %671 = vmatmul.bf16.gmra.mxu0 %v520
        %v672 = vpop.f32.mrf.mxu0
        %v673 = vadd.f32 %v460, %v672
        %v674 = vpop.f32.mrf.mxu0
        %v675 = vadd.f32 %v460, %v674
        %676 = vmatmul.bf16.gmra.mxu0 %v522
        %v677 = vpop.f32.mrf.mxu0
        %v678 = vadd.f32 %v460, %v677
        %v679 = vpop.f32.mrf.mxu0
        %v680 = vadd.f32 %v460, %v679
        %681 = vmatmul.bf16.gmra.mxu0 %v524
        %v682 = vpop.f32.mrf.mxu0
        %v683 = vadd.f32 %v460, %v682
        %v684 = vpop.f32.mrf.mxu0
        %v685 = vadd.f32 %v460, %v684
        %686 = vdwg.mxu0
        %687 = vmatpush.bf16.msra.mxu0 %v621
        %688 = vmatpush.bf16.msra.mxu0 %v620
        %689 = vmatpush.bf16.msra.mxu0 %v619
        %690 = vmatpush.bf16.msra.mxu0 %v618
        %691 = vmatpush.bf16.msra.mxu0 %v617
        %692 = vmatpush.bf16.msra.mxu0 %v616
        %693 = vmatpush.bf16.msra.mxu0 %v615
        %694 = vmatpush.bf16.msra.mxu0 %v614
        %695 = vmatmul.bf16.gmra.mxu0 %v511
        %v696 = vpop.f32.mrf.mxu0
        %v697 = vadd.f32 %v648, %v696
        %v698 = vpop.f32.mrf.mxu0
        %v699 = vadd.f32 %v650, %v698
        %700 = vmatmul.bf16.gmra.mxu0 %v513
        %v701 = vpop.f32.mrf.mxu0
        %v702 = vadd.f32 %v653, %v701
        %v703 = vpop.f32.mrf.mxu0
        %v704 = vadd.f32 %v655, %v703
        %705 = vmatmul.bf16.gmra.mxu0 %v515
        %v706 = vpop.f32.mrf.mxu0
        %v707 = vadd.f32 %v658, %v706
        %v708 = vpop.f32.mrf.mxu0
        %v709 = vadd.f32 %v660, %v708
        %710 = vmatmul.bf16.gmra.mxu0 %v517
        %v711 = vpop.f32.mrf.mxu0
        %v712 = vadd.f32 %v663, %v711
        %v713 = vpop.f32.mrf.mxu0
        %v714 = vadd.f32 %v665, %v713
        %715 = vmatmul.bf16.gmra.mxu0 %v519
        %v716 = vpop.f32.mrf.mxu0
        %v717 = vadd.f32 %v668, %v716
        %v718 = vpop.f32.mrf.mxu0
        %v719 = vadd.f32 %v670, %v718
        %720 = vmatmul.bf16.gmra.mxu0 %v521
        %v721 = vpop.f32.mrf.mxu0
        %v722 = vadd.f32 %v673, %v721
        %v723 = vpop.f32.mrf.mxu0
        %v724 = vadd.f32 %v675, %v723
        %725 = vmatmul.bf16.gmra.mxu0 %v523
        %v726 = vpop.f32.mrf.mxu0
        %v727 = vadd.f32 %v678, %v726
        %v728 = vpop.f32.mrf.mxu0
        %v729 = vadd.f32 %v680, %v728
        %730 = vmatmul.bf16.gmra.mxu0 %v525
        %v731 = vpop.f32.mrf.mxu0
        %v732 = vadd.f32 %v683, %v731
        %v733 = vpop.f32.mrf.mxu0
        %v734 = vadd.f32 %v685, %v733
        %735 = vdwg.mxu0
        %v736 = vpack.c.bf16 %v699, %v697
        %v737 = vpack.c.bf16 %v704, %v702
        %v738 = vpack.c.bf16 %v709, %v707
        %v739 = vpack.c.bf16 %v714, %v712
        %v740 = vpack.c.bf16 %v719, %v717
        %v741 = vpack.c.bf16 %v724, %v722
        %v742 = vpack.c.bf16 %v729, %v727
        %v743 = vpack.c.bf16 %v734, %v732
        %v744 = vld [vmem:[#allocation7] sm:$0xf]
        %v745 = vld [vmem:[#allocation7 + $0x4] sm:$0xf]
        %v746 = vld [vmem:[#allocation7 + $0x8] sm:$0xf]
        %v747 = vld [vmem:[#allocation7 + $0xc] sm:$0xf]
        %v748 = vld [vmem:[#allocation7 + $0x10] sm:$0xf]
        %v749 = vld [vmem:[#allocation7 + $0x14] sm:$0xf]
        %v750 = vld [vmem:[#allocation7 + $0x18] sm:$0xf]
        %v751 = vld [vmem:[#allocation7 + $0x1c] sm:$0xf]
        %v752 = vld [vmem:[#allocation7 + $0x20] sm:$0xf]
        %v753 = vld [vmem:[#allocation7 + $0x24] sm:$0xf]
        %v754 = vld [vmem:[#allocation7 + $0x28] sm:$0xf]
        %v755 = vld [vmem:[#allocation7 + $0x2c] sm:$0xf]
        %v756 = vld [vmem:[#allocation7 + $0x30] sm:$0xf]
        %v757 = vld [vmem:[#allocation7 + $0x34] sm:$0xf]
        %v758 = vld [vmem:[#allocation7 + $0x38] sm:$0xf]
        %v759 = vld [vmem:[#allocation7 + $0x3c] sm:$0xf]
        %v760 = vld [vmem:[#allocation8] sm:$0x1]
        %v762 = vperm.slane %v760, 0
        %v780 = vunpack.c.l.b16 %v744
        %v781 = vunpack.c.l.b16 %v745
        %v782 = vunpack.c.l.b16 %v746
        %v783 = vunpack.c.l.b16 %v747
        %v784 = vunpack.c.l.b16 %v748
        %v785 = vunpack.c.l.b16 %v749
        %v786 = vunpack.c.l.b16 %v750
        %v787 = vunpack.c.l.b16 %v751
        %v788 = vunpack.c.l.b16 %v752
        %v789 = vunpack.c.l.b16 %v753
        %v790 = vunpack.c.l.b16 %v754
        %v791 = vunpack.c.l.b16 %v755
        %v792 = vunpack.c.l.b16 %v756
        %v793 = vunpack.c.l.b16 %v757
        %v794 = vunpack.c.l.b16 %v758
        %v795 = vunpack.c.l.b16 %v759
        %v796 = vpack.c.b16 %v781, %v780
        %v797 = vpack.c.b16 %v783, %v782
        %v798 = vpack.c.b16 %v785, %v784
        %v799 = vpack.c.b16 %v787, %v786
        %v800 = vpack.c.b16 %v789, %v788
        %v801 = vpack.c.b16 %v791, %v790
        %v802 = vpack.c.b16 %v793, %v792
        %v803 = vpack.c.b16 %v795, %v794
        %812 = vmatpush.bf16.msra.mxu0 %v803
        %813 = vmatpush.bf16.msra.mxu0 %v802
        %814 = vmatpush.bf16.msra.mxu0 %v801
        %815 = vmatpush.bf16.msra.mxu0 %v800
        %816 = vmatpush.bf16.msra.mxu0 %v799
        %817 = vmatpush.bf16.msra.mxu0 %v798
        %818 = vmatpush.bf16.msra.mxu0 %v797
        %819 = vmatpush.bf16.msra.mxu0 %v796
        %820 = vmatmul.bf16.gmra.mxu0 %v736
        %v821 = vpop.f32.mrf.mxu0
        %v822 = vadd.f32 %v762, %v821
        %v823 = vpop.f32.mrf.mxu0
        %v824 = vadd.f32 %v762, %v823
        %825 = vmatmul.bf16.gmra.mxu0 %v737
        %v826 = vpop.f32.mrf.mxu0
        %v827 = vadd.f32 %v762, %v826
        %v828 = vpop.f32.mrf.mxu0
        %v829 = vadd.f32 %v762, %v828
        %830 = vmatmul.bf16.gmra.mxu0 %v738
        %v831 = vpop.f32.mrf.mxu0
        %v832 = vadd.f32 %v762, %v831
        %v833 = vpop.f32.mrf.mxu0
        %v834 = vadd.f32 %v762, %v833
        %835 = vmatmul.bf16.gmra.mxu0 %v739
        %v836 = vpop.f32.mrf.mxu0
        %v837 = vadd.f32 %v762, %v836
        %v838 = vpop.f32.mrf.mxu0
        %v839 = vadd.f32 %v762, %v838
        %840 = vmatmul.bf16.gmra.mxu0 %v740
        %v841 = vpop.f32.mrf.mxu0
        %v842 = vadd.f32 %v762, %v841
        %v843 = vpop.f32.mrf.mxu0
        %v844 = vadd.f32 %v762, %v843
        %845 = vmatmul.bf16.gmra.mxu0 %v741
        %v846 = vpop.f32.mrf.mxu0
        %v847 = vadd.f32 %v762, %v846
        %v848 = vpop.f32.mrf.mxu0
        %v849 = vadd.f32 %v762, %v848
        %850 = vmatmul.bf16.gmra.mxu0 %v742
        %v851 = vpop.f32.mrf.mxu0
        %v852 = vadd.f32 %v762, %v851
        %v853 = vpop.f32.mrf.mxu0
        %v854 = vadd.f32 %v762, %v853
        %855 = vmatmul.bf16.gmra.mxu0 %v743
        %v856 = vpop.f32.mrf.mxu0
        %v857 = vadd.f32 %v762, %v856
        %v858 = vpop.f32.mrf.mxu0
        %v859 = vadd.f32 %v762, %v858
        %860 = vdwg.mxu0
        %v861 = vpack.c.bf16 %v824, %v822
        %v862 = vpack.c.bf16 %v829, %v827
        %v863 = vpack.c.bf16 %v834, %v832
        %v864 = vpack.c.bf16 %v839, %v837
        %v865 = vpack.c.bf16 %v844, %v842
        %v866 = vpack.c.bf16 %v849, %v847
        %v867 = vpack.c.bf16 %v854, %v852
        %v868 = vpack.c.bf16 %v859, %v857
        %v869 = vld [vmem:[#allocation10] sm:$0xff]
        %v870 = vld [vmem:[#allocation10 + $0x8] sm:$0xff]
        %v871 = vld [vmem:[#allocation10 + $0x10] sm:$0xff]
        %v872 = vld [vmem:[#allocation10 + $0x18] sm:$0xff]
        %v873 = vld [vmem:[#allocation10 + $0x20] sm:$0xff]
        %v874 = vld [vmem:[#allocation10 + $0x28] sm:$0xff]
        %v875 = vld [vmem:[#allocation10 + $0x30] sm:$0xff]
        %v876 = vld [vmem:[#allocation10 + $0x38] sm:$0xff]
        %v877 = vld [vmem:[#allocation10 + $0x40] sm:$0xff]
        %v878 = vld [vmem:[#allocation10 + $0x48] sm:$0xff]
        %v879 = vld [vmem:[#allocation10 + $0x50] sm:$0xff]
        %v880 = vld [vmem:[#allocation10 + $0x58] sm:$0xff]
        %v881 = vld [vmem:[#allocation10 + $0x60] sm:$0xff]
        %v882 = vld [vmem:[#allocation10 + $0x68] sm:$0xff]
        %v883 = vld [vmem:[#allocation10 + $0x70] sm:$0xff]
        %v884 = vld [vmem:[#allocation10 + $0x78] sm:$0xff]
        %v885 = vld [vmem:[%s6] sm:$0x3]
        %v887 = vperm.slane %v885, 0
        %v888 = vperm.slane %v885, 1
        %v907 = vunpack.c.l.b16 %v869
        %v908 = vunpack.c.h.b16 %v869
        %v909 = vunpack.c.l.b16 %v870
        %v910 = vunpack.c.h.b16 %v870
        %v911 = vunpack.c.l.b16 %v871
        %v912 = vunpack.c.h.b16 %v871
        %v913 = vunpack.c.l.b16 %v872
        %v914 = vunpack.c.h.b16 %v872
        %v915 = vunpack.c.l.b16 %v873
        %v916 = vunpack.c.h.b16 %v873
        %v917 = vunpack.c.l.b16 %v874
        %v918 = vunpack.c.h.b16 %v874
        %v919 = vunpack.c.l.b16 %v875
        %v920 = vunpack.c.h.b16 %v875
        %v921 = vunpack.c.l.b16 %v876
        %v922 = vunpack.c.h.b16 %v876
        %v923 = vunpack.c.l.b16 %v877
        %v924 = vunpack.c.h.b16 %v877
        %v925 = vunpack.c.l.b16 %v878
        %v926 = vunpack.c.h.b16 %v878
        %v927 = vunpack.c.l.b16 %v879
        %v928 = vunpack.c.h.b16 %v879
        %v929 = vunpack.c.l.b16 %v880
        %v930 = vunpack.c.h.b16 %v880
        %v931 = vunpack.c.l.b16 %v881
        %v932 = vunpack.c.h.b16 %v881
        %v933 = vunpack.c.l.b16 %v882
        %v934 = vunpack.c.h.b16 %v882
        %v935 = vunpack.c.l.b16 %v883
        %v936 = vunpack.c.h.b16 %v883
        %v937 = vunpack.c.l.b16 %v884
        %v938 = vunpack.c.h.b16 %v884
        %v939 = vpack.c.b16 %v909, %v907
        %v940 = vpack.c.b16 %v910, %v908
        %v941 = vpack.c.b16 %v913, %v911
        %v942 = vpack.c.b16 %v914, %v912
        %v943 = vpack.c.b16 %v917, %v915
        %v944 = vpack.c.b16 %v918, %v916
        %v945 = vpack.c.b16 %v921, %v919
        %v946 = vpack.c.b16 %v922, %v920
        %v947 = vpack.c.b16 %v925, %v923
        %v948 = vpack.c.b16 %v926, %v924
        %v949 = vpack.c.b16 %v929, %v927
        %v950 = vpack.c.b16 %v930, %v928
        %v951 = vpack.c.b16 %v933, %v931
        %v952 = vpack.c.b16 %v934, %v932
        %v953 = vpack.c.b16 %v937, %v935
        %v954 = vpack.c.b16 %v938, %v936
        %971 = vmatpush.bf16.msra.mxu0 %v953
        %972 = vmatpush.bf16.msra.mxu0 %v951
        %973 = vmatpush.bf16.msra.mxu0 %v949
        %974 = vmatpush.bf16.msra.mxu0 %v947
        %975 = vmatpush.bf16.msra.mxu0 %v945
        %976 = vmatpush.bf16.msra.mxu0 %v943
        %977 = vmatpush.bf16.msra.mxu0 %v941
        %978 = vmatpush.bf16.msra.mxu0 %v939
        %979 = vmatmul.bf16.gmra.mxu0 %v861
        %v980 = vpop.f32.mrf.mxu0
        %v981 = vadd.f32 %v887, %v980
        %v982 = vpop.f32.mrf.mxu0
        %v983 = vadd.f32 %v887, %v982
        %984 = vmatmul.bf16.gmra.mxu0 %v862
        %v985 = vpop.f32.mrf.mxu0
        %v986 = vadd.f32 %v887, %v985
        %v987 = vpop.f32.mrf.mxu0
        %v988 = vadd.f32 %v887, %v987
        %989 = vmatmul.bf16.gmra.mxu0 %v863
        %v990 = vpop.f32.mrf.mxu0
        %v991 = vadd.f32 %v887, %v990
        %v992 = vpop.f32.mrf.mxu0
        %v993 = vadd.f32 %v887, %v992
        %994 = vmatmul.bf16.gmra.mxu0 %v864
        %v995 = vpop.f32.mrf.mxu0
        %v996 = vadd.f32 %v887, %v995
        %v997 = vpop.f32.mrf.mxu0
        %v998 = vadd.f32 %v887, %v997
        %999 = vmatmul.bf16.gmra.mxu0 %v865
        %v1000 = vpop.f32.mrf.mxu0
        %v1001 = vadd.f32 %v887, %v1000
        %v1002 = vpop.f32.mrf.mxu0
        %v1003 = vadd.f32 %v887, %v1002
        %1004 = vmatmul.bf16.gmra.mxu0 %v866
        %v1005 = vpop.f32.mrf.mxu0
        %v1006 = vadd.f32 %v887, %v1005
        %v1007 = vpop.f32.mrf.mxu0
        %v1008 = vadd.f32 %v887, %v1007
        %1009 = vmatmul.bf16.gmra.mxu0 %v867
        %v1010 = vpop.f32.mrf.mxu0
        %v1011 = vadd.f32 %v887, %v1010
        %v1012 = vpop.f32.mrf.mxu0
        %v1013 = vadd.f32 %v887, %v1012
        %1014 = vmatmul.bf16.gmra.mxu0 %v868
        %v1015 = vpop.f32.mrf.mxu0
        %v1016 = vadd.f32 %v887, %v1015
        %v1017 = vpop.f32.mrf.mxu0
        %v1018 = vadd.f32 %v887, %v1017
        %1019 = vdwg.mxu0
        %1020 = vmatpush.bf16.msra.mxu0 %v954
        %1021 = vmatpush.bf16.msra.mxu0 %v952
        %1022 = vmatpush.bf16.msra.mxu0 %v950
        %1023 = vmatpush.bf16.msra.mxu0 %v948
        %1024 = vmatpush.bf16.msra.mxu0 %v946
        %1025 = vmatpush.bf16.msra.mxu0 %v944
        %1026 = vmatpush.bf16.msra.mxu0 %v942
        %1027 = vmatpush.bf16.msra.mxu0 %v940
        %1028 = vmatmul.bf16.gmra.mxu0 %v861
        %v1029 = vpop.f32.mrf.mxu0
        %v1030 = vadd.f32 %v888, %v1029
        %v1031 = vpop.f32.mrf.mxu0
        %v1032 = vadd.f32 %v888, %v1031
        %1033 = vmatmul.bf16.gmra.mxu0 %v862
        %v1034 = vpop.f32.mrf.mxu0
        %v1035 = vadd.f32 %v888, %v1034
        %v1036 = vpop.f32.mrf.mxu0
        %v1037 = vadd.f32 %v888, %v1036
        %1038 = vmatmul.bf16.gmra.mxu0 %v863
        %v1039 = vpop.f32.mrf.mxu0
        %v1040 = vadd.f32 %v888, %v1039
        %v1041 = vpop.f32.mrf.mxu0
        %v1042 = vadd.f32 %v888, %v1041
        %1043 = vmatmul.bf16.gmra.mxu0 %v864
        %v1044 = vpop.f32.mrf.mxu0
        %v1045 = vadd.f32 %v888, %v1044
        %v1046 = vpop.f32.mrf.mxu0
        %v1047 = vadd.f32 %v888, %v1046
        %1048 = vmatmul.bf16.gmra.mxu0 %v865
        %v1049 = vpop.f32.mrf.mxu0
        %v1050 = vadd.f32 %v888, %v1049
        %v1051 = vpop.f32.mrf.mxu0
        %v1052 = vadd.f32 %v888, %v1051
        %1053 = vmatmul.bf16.gmra.mxu0 %v866
        %v1054 = vpop.f32.mrf.mxu0
        %v1055 = vadd.f32 %v888, %v1054
        %v1056 = vpop.f32.mrf.mxu0
        %v1057 = vadd.f32 %v888, %v1056
        %1058 = vmatmul.bf16.gmra.mxu0 %v867
        %v1059 = vpop.f32.mrf.mxu0
        %v1060 = vadd.f32 %v888, %v1059
        %v1061 = vpop.f32.mrf.mxu0
        %v1062 = vadd.f32 %v888, %v1061
        %1063 = vmatmul.bf16.gmra.mxu0 %v868
        %v1064 = vpop.f32.mrf.mxu0
        %v1065 = vadd.f32 %v888, %v1064
        %v1066 = vpop.f32.mrf.mxu0
        %v1067 = vadd.f32 %v888, %v1066
        %1068 = vdwg.mxu0
        %v1069 = vld [vmem:[#allocation11] sm:$0xff]
        %v1070 = vld [vmem:[#allocation11 + $0x8] sm:$0xff]
        %v1071 = vld [vmem:[#allocation11 + $0x10] sm:$0xff]
        %v1072 = vld [vmem:[#allocation11 + $0x18] sm:$0xff]
        %v1073 = vld [vmem:[#allocation11 + $0x20] sm:$0xff]
        %v1074 = vld [vmem:[#allocation11 + $0x28] sm:$0xff]
        %v1075 = vld [vmem:[#allocation11 + $0x30] sm:$0xff]
        %v1076 = vld [vmem:[#allocation11 + $0x38] sm:$0xff]
        %v1077 = vld [vmem:[#allocation11 + $0x40] sm:$0xff]
        %v1078 = vld [vmem:[#allocation11 + $0x48] sm:$0xff]
        %v1079 = vld [vmem:[#allocation11 + $0x50] sm:$0xff]
        %v1080 = vld [vmem:[#allocation11 + $0x58] sm:$0xff]
        %v1081 = vld [vmem:[#allocation11 + $0x60] sm:$0xff]
        %v1082 = vld [vmem:[#allocation11 + $0x68] sm:$0xff]
        %v1083 = vld [vmem:[#allocation11 + $0x70] sm:$0xff]
        %v1084 = vld [vmem:[#allocation11 + $0x78] sm:$0xff]
        %v1085 = vld [vmem:[#allocation11 + $0x80] sm:$0xff]
        %v1086 = vld [vmem:[#allocation11 + $0x88] sm:$0xff]
        %v1087 = vld [vmem:[#allocation11 + $0x90] sm:$0xff]
        %v1088 = vld [vmem:[#allocation11 + $0x98] sm:$0xff]
        %v1089 = vld [vmem:[#allocation11 + $0xa0] sm:$0xff]
        %v1090 = vld [vmem:[#allocation11 + $0xa8] sm:$0xff]
        %v1091 = vld [vmem:[#allocation11 + $0xb0] sm:$0xff]
        %v1092 = vld [vmem:[#allocation11 + $0xb8] sm:$0xff]
        %v1093 = vld [vmem:[#allocation11 + $0xc0] sm:$0xff]
        %v1094 = vld [vmem:[#allocation11 + $0xc8] sm:$0xff]
        %v1095 = vld [vmem:[#allocation11 + $0xd0] sm:$0xff]
        %v1096 = vld [vmem:[#allocation11 + $0xd8] sm:$0xff]
        %v1097 = vld [vmem:[#allocation11 + $0xe0] sm:$0xff]
        %v1098 = vld [vmem:[#allocation11 + $0xe8] sm:$0xff]
        %v1099 = vld [vmem:[#allocation11 + $0xf0] sm:$0xff]
        %v1100 = vld [vmem:[#allocation11 + $0xf8] sm:$0xff]
        %v1101 = vld [vmem:[#allocation11 + $0x100] sm:$0xff]
        %v1102 = vld [vmem:[#allocation11 + $0x108] sm:$0xff]
        %v1103 = vld [vmem:[#allocation11 + $0x110] sm:$0xff]
        %v1104 = vld [vmem:[#allocation11 + $0x118] sm:$0xff]
        %v1105 = vld [vmem:[#allocation11 + $0x120] sm:$0xff]
        %v1106 = vld [vmem:[#allocation11 + $0x128] sm:$0xff]
        %v1107 = vld [vmem:[#allocation11 + $0x130] sm:$0xff]
        %v1108 = vld [vmem:[#allocation11 + $0x138] sm:$0xff]
        %v1109 = vld [vmem:[#allocation11 + $0x140] sm:$0xff]
        %v1110 = vld [vmem:[#allocation11 + $0x148] sm:$0xff]
        %v1111 = vld [vmem:[#allocation11 + $0x150] sm:$0xff]
        %v1112 = vld [vmem:[#allocation11 + $0x158] sm:$0xff]
        %v1113 = vld [vmem:[#allocation11 + $0x160] sm:$0xff]
        %v1114 = vld [vmem:[#allocation11 + $0x168] sm:$0xff]
        %v1115 = vld [vmem:[#allocation11 + $0x170] sm:$0xff]
        %v1116 = vld [vmem:[#allocation11 + $0x178] sm:$0xff]
        %v1117 = vld [vmem:[#allocation11 + $0x180] sm:$0xff]
        %v1118 = vld [vmem:[#allocation11 + $0x188] sm:$0xff]
        %v1119 = vld [vmem:[#allocation11 + $0x190] sm:$0xff]
        %v1120 = vld [vmem:[#allocation11 + $0x198] sm:$0xff]
        %v1121 = vld [vmem:[#allocation11 + $0x1a0] sm:$0xff]
        %v1122 = vld [vmem:[#allocation11 + $0x1a8] sm:$0xff]
        %v1123 = vld [vmem:[#allocation11 + $0x1b0] sm:$0xff]
        %v1124 = vld [vmem:[#allocation11 + $0x1b8] sm:$0xff]
        %v1125 = vld [vmem:[#allocation11 + $0x1c0] sm:$0xff]
        %v1126 = vld [vmem:[#allocation11 + $0x1c8] sm:$0xff]
        %v1127 = vld [vmem:[#allocation11 + $0x1d0] sm:$0xff]
        %v1128 = vld [vmem:[#allocation11 + $0x1d8] sm:$0xff]
        %v1129 = vld [vmem:[#allocation11 + $0x1e0] sm:$0xff]
        %v1130 = vld [vmem:[#allocation11 + $0x1e8] sm:$0xff]
        %v1131 = vld [vmem:[#allocation11 + $0x1f0] sm:$0xff]
        %v1132 = vld [vmem:[#allocation11 + $0x1f8] sm:$0xff]
        %1133 = vmatpush.msra.mxu0 %v1099
        %1134 = vmatpush.msra.mxu0 %v1097
        %1135 = vmatpush.msra.mxu0 %v1095
        %1136 = vmatpush.msra.mxu0 %v1093
        %1137 = vmatpush.msra.mxu0 %v1091
        %1138 = vmatpush.msra.mxu0 %v1089
        %1139 = vmatpush.msra.mxu0 %v1087
        %1140 = vmatpush.msra.mxu0 %v1085
        %1141 = vmatpush.msra.mxu0 %v1083
        %1142 = vmatpush.msra.mxu0 %v1081
        %1143 = vmatpush.msra.mxu0 %v1079
        %1144 = vmatpush.msra.mxu0 %v1077
        %1145 = vmatpush.msra.mxu0 %v1075
        %1146 = vmatpush.msra.mxu0 %v1073
        %1147 = vmatpush.msra.mxu0 %v1071
        %1148 = vmatpush.msra.mxu0 %v1069
        %1149 = vmatmul.f32.gmra.mxu0 %v981
        %v1150 = vpop.f32.mrf.mxu0
        %v1151 = vadd.f32 0.0, %v1150
        %1152 = vmatmul.f32.gmra.mxu0 %v983
        %v1153 = vpop.f32.mrf.mxu0
        %v1154 = vadd.f32 0.0, %v1153
        %1155 = vmatmul.f32.gmra.mxu0 %v986
        %v1156 = vpop.f32.mrf.mxu0
        %v1157 = vadd.f32 0.0, %v1156
        %1158 = vmatmul.f32.gmra.mxu0 %v988
        %v1159 = vpop.f32.mrf.mxu0
        %v1160 = vadd.f32 0.0, %v1159
        %1161 = vmatmul.f32.gmra.mxu0 %v991
        %v1162 = vpop.f32.mrf.mxu0
        %v1163 = vadd.f32 0.0, %v1162
        %1164 = vmatmul.f32.gmra.mxu0 %v993
        %v1165 = vpop.f32.mrf.mxu0
        %v1166 = vadd.f32 0.0, %v1165
        %1167 = vmatmul.f32.gmra.mxu0 %v996
        %v1168 = vpop.f32.mrf.mxu0
        %v1169 = vadd.f32 0.0, %v1168
        %1170 = vmatmul.f32.gmra.mxu0 %v998
        %v1171 = vpop.f32.mrf.mxu0
        %v1172 = vadd.f32 0.0, %v1171
        %1173 = vmatmul.f32.gmra.mxu0 %v1001
        %v1174 = vpop.f32.mrf.mxu0
        %v1175 = vadd.f32 0.0, %v1174
        %1176 = vmatmul.f32.gmra.mxu0 %v1003
        %v1177 = vpop.f32.mrf.mxu0
        %v1178 = vadd.f32 0.0, %v1177
        %1179 = vmatmul.f32.gmra.mxu0 %v1006
        %v1180 = vpop.f32.mrf.mxu0
        %v1181 = vadd.f32 0.0, %v1180
        %1182 = vmatmul.f32.gmra.mxu0 %v1008
        %v1183 = vpop.f32.mrf.mxu0
        %v1184 = vadd.f32 0.0, %v1183
        %1185 = vmatmul.f32.gmra.mxu0 %v1011
        %v1186 = vpop.f32.mrf.mxu0
        %v1187 = vadd.f32 0.0, %v1186
        %1188 = vmatmul.f32.gmra.mxu0 %v1013
        %v1189 = vpop.f32.mrf.mxu0
        %v1190 = vadd.f32 0.0, %v1189
        %1191 = vmatmul.f32.gmra.mxu0 %v1016
        %v1192 = vpop.f32.mrf.mxu0
        %v1193 = vadd.f32 0.0, %v1192
        %1194 = vmatmul.f32.gmra.mxu0 %v1018
        %v1195 = vpop.f32.mrf.mxu0
        %v1196 = vadd.f32 0.0, %v1195
        %1197 = vdwg.mxu0
        %1198 = vmatpush.msra.mxu0 %v1131
        %1199 = vmatpush.msra.mxu0 %v1129
        %1200 = vmatpush.msra.mxu0 %v1127
        %1201 = vmatpush.msra.mxu0 %v1125
        %1202 = vmatpush.msra.mxu0 %v1123
        %1203 = vmatpush.msra.mxu0 %v1121
        %1204 = vmatpush.msra.mxu0 %v1119
        %1205 = vmatpush.msra.mxu0 %v1117
        %1206 = vmatpush.msra.mxu0 %v1115
        %1207 = vmatpush.msra.mxu0 %v1113
        %1208 = vmatpush.msra.mxu0 %v1111
        %1209 = vmatpush.msra.mxu0 %v1109
        %1210 = vmatpush.msra.mxu0 %v1107
        %1211 = vmatpush.msra.mxu0 %v1105
        %1212 = vmatpush.msra.mxu0 %v1103
        %1213 = vmatpush.msra.mxu0 %v1101
        %1214 = vmatmul.f32.gmra.mxu0 %v1030
        %v1215 = vpop.f32.mrf.mxu0
        %v1216 = vadd.f32 %v1151, %v1215
        %1217 = vmatmul.f32.gmra.mxu0 %v1032
        %v1218 = vpop.f32.mrf.mxu0
        %v1219 = vadd.f32 %v1154, %v1218
        %1220 = vmatmul.f32.gmra.mxu0 %v1035
        %v1221 = vpop.f32.mrf.mxu0
        %v1222 = vadd.f32 %v1157, %v1221
        %1223 = vmatmul.f32.gmra.mxu0 %v1037
        %v1224 = vpop.f32.mrf.mxu0
        %v1225 = vadd.f32 %v1160, %v1224
        %1226 = vmatmul.f32.gmra.mxu0 %v1040
        %v1227 = vpop.f32.mrf.mxu0
        %v1228 = vadd.f32 %v1163, %v1227
        %1229 = vmatmul.f32.gmra.mxu0 %v1042
        %v1230 = vpop.f32.mrf.mxu0
        %v1231 = vadd.f32 %v1166, %v1230
        %1232 = vmatmul.f32.gmra.mxu0 %v1045
        %v1233 = vpop.f32.mrf.mxu0
        %v1234 = vadd.f32 %v1169, %v1233
        %1235 = vmatmul.f32.gmra.mxu0 %v1047
        %v1236 = vpop.f32.mrf.mxu0
        %v1237 = vadd.f32 %v1172, %v1236
        %1238 = vmatmul.f32.gmra.mxu0 %v1050
        %v1239 = vpop.f32.mrf.mxu0
        %v1240 = vadd.f32 %v1175, %v1239
        %1241 = vmatmul.f32.gmra.mxu0 %v1052
        %v1242 = vpop.f32.mrf.mxu0
        %v1243 = vadd.f32 %v1178, %v1242
        %1244 = vmatmul.f32.gmra.mxu0 %v1055
        %v1245 = vpop.f32.mrf.mxu0
        %v1246 = vadd.f32 %v1181, %v1245
        %1247 = vmatmul.f32.gmra.mxu0 %v1057
        %v1248 = vpop.f32.mrf.mxu0
        %v1249 = vadd.f32 %v1184, %v1248
        %1250 = vmatmul.f32.gmra.mxu0 %v1060
        %v1251 = vpop.f32.mrf.mxu0
        %v1252 = vadd.f32 %v1187, %v1251
        %1253 = vmatmul.f32.gmra.mxu0 %v1062
        %v1254 = vpop.f32.mrf.mxu0
        %v1255 = vadd.f32 %v1190, %v1254
        %1256 = vmatmul.f32.gmra.mxu0 %v1065
        %v1257 = vpop.f32.mrf.mxu0
        %v1258 = vadd.f32 %v1193, %v1257
        %1259 = vmatmul.f32.gmra.mxu0 %v1067
        %v1260 = vpop.f32.mrf.mxu0
        %v1261 = vadd.f32 %v1196, %v1260
        %1262 = vdwg.mxu0
        %1263 = vmatpush.msra.mxu0 %v1100
        %1264 = vmatpush.msra.mxu0 %v1098
        %1265 = vmatpush.msra.mxu0 %v1096
        %1266 = vmatpush.msra.mxu0 %v1094
        %1267 = vmatpush.msra.mxu0 %v1092
        %1268 = vmatpush.msra.mxu0 %v1090
        %1269 = vmatpush.msra.mxu0 %v1088
        %1270 = vmatpush.msra.mxu0 %v1086
        %1271 = vmatpush.msra.mxu0 %v1084
        %1272 = vmatpush.msra.mxu0 %v1082
        %1273 = vmatpush.msra.mxu0 %v1080
        %1274 = vmatpush.msra.mxu0 %v1078
        %1275 = vmatpush.msra.mxu0 %v1076
        %1276 = vmatpush.msra.mxu0 %v1074
        %1277 = vmatpush.msra.mxu0 %v1072
        %1278 = vmatpush.msra.mxu0 %v1070
        %1279 = vmatmul.f32.gmra.mxu0 %v981
        %v1280 = vpop.f32.mrf.mxu0
        %v1281 = vadd.f32 0.0, %v1280
        %1282 = vmatmul.f32.gmra.mxu0 %v983
        %v1283 = vpop.f32.mrf.mxu0
        %v1284 = vadd.f32 0.0, %v1283
        %1285 = vmatmul.f32.gmra.mxu0 %v986
        %v1286 = vpop.f32.mrf.mxu0
        %v1287 = vadd.f32 0.0, %v1286
        %1288 = vmatmul.f32.gmra.mxu0 %v988
        %v1289 = vpop.f32.mrf.mxu0
        %v1290 = vadd.f32 0.0, %v1289
        %1291 = vmatmul.f32.gmra.mxu0 %v991
        %v1292 = vpop.f32.mrf.mxu0
        %v1293 = vadd.f32 0.0, %v1292
        %1294 = vmatmul.f32.gmra.mxu0 %v993
        %v1295 = vpop.f32.mrf.mxu0
        %v1296 = vadd.f32 0.0, %v1295
        %1297 = vmatmul.f32.gmra.mxu0 %v996
        %v1298 = vpop.f32.mrf.mxu0
        %v1299 = vadd.f32 0.0, %v1298
        %1300 = vmatmul.f32.gmra.mxu0 %v998
        %v1301 = vpop.f32.mrf.mxu0
        %v1302 = vadd.f32 0.0, %v1301
        %1303 = vmatmul.f32.gmra.mxu0 %v1001
        %v1304 = vpop.f32.mrf.mxu0
        %v1305 = vadd.f32 0.0, %v1304
        %1306 = vmatmul.f32.gmra.mxu0 %v1003
        %v1307 = vpop.f32.mrf.mxu0
        %v1308 = vadd.f32 0.0, %v1307
        %1309 = vmatmul.f32.gmra.mxu0 %v1006
        %v1310 = vpop.f32.mrf.mxu0
        %v1311 = vadd.f32 0.0, %v1310
        %1312 = vmatmul.f32.gmra.mxu0 %v1008
        %v1313 = vpop.f32.mrf.mxu0
        %v1314 = vadd.f32 0.0, %v1313
        %1315 = vmatmul.f32.gmra.mxu0 %v1011
        %v1316 = vpop.f32.mrf.mxu0
        %v1317 = vadd.f32 0.0, %v1316
        %1318 = vmatmul.f32.gmra.mxu0 %v1013
        %v1319 = vpop.f32.mrf.mxu0
        %v1320 = vadd.f32 0.0, %v1319
        %1321 = vmatmul.f32.gmra.mxu0 %v1016
        %v1322 = vpop.f32.mrf.mxu0
        %v1323 = vadd.f32 0.0, %v1322
        %1324 = vmatmul.f32.gmra.mxu0 %v1018
        %v1325 = vpop.f32.mrf.mxu0
        %v1326 = vadd.f32 0.0, %v1325
        %1327 = vdwg.mxu0
        %1328 = vmatpush.msra.mxu0 %v1132
        %1329 = vmatpush.msra.mxu0 %v1130
        %1330 = vmatpush.msra.mxu0 %v1128
        %1331 = vmatpush.msra.mxu0 %v1126
        %1332 = vmatpush.msra.mxu0 %v1124
        %1333 = vmatpush.msra.mxu0 %v1122
        %1334 = vmatpush.msra.mxu0 %v1120
        %1335 = vmatpush.msra.mxu0 %v1118
        %1336 = vmatpush.msra.mxu0 %v1116
        %1337 = vmatpush.msra.mxu0 %v1114
        %1338 = vmatpush.msra.mxu0 %v1112
        %1339 = vmatpush.msra.mxu0 %v1110
        %1340 = vmatpush.msra.mxu0 %v1108
        %1341 = vmatpush.msra.mxu0 %v1106
        %1342 = vmatpush.msra.mxu0 %v1104
        %1343 = vmatpush.msra.mxu0 %v1102
        %1344 = vmatmul.f32.gmra.mxu0 %v1030
        %v1345 = vpop.f32.mrf.mxu0
        %v1346 = vadd.f32 %v1281, %v1345
        %1347 = vmatmul.f32.gmra.mxu0 %v1032
        %v1348 = vpop.f32.mrf.mxu0
        %v1349 = vadd.f32 %v1284, %v1348
        %1350 = vmatmul.f32.gmra.mxu0 %v1035
        %v1351 = vpop.f32.mrf.mxu0
        %v1352 = vadd.f32 %v1287, %v1351
        %1353 = vmatmul.f32.gmra.mxu0 %v1037
        %v1354 = vpop.f32.mrf.mxu0
        %v1355 = vadd.f32 %v1290, %v1354
        %1356 = vmatmul.f32.gmra.mxu0 %v1040
        %v1357 = vpop.f32.mrf.mxu0
        %v1358 = vadd.f32 %v1293, %v1357
        %1359 = vmatmul.f32.gmra.mxu0 %v1042
        %v1360 = vpop.f32.mrf.mxu0
        %v1361 = vadd.f32 %v1296, %v1360
        %1362 = vmatmul.f32.gmra.mxu0 %v1045
        %v1363 = vpop.f32.mrf.mxu0
        %v1364 = vadd.f32 %v1299, %v1363
        %1365 = vmatmul.f32.gmra.mxu0 %v1047
        %v1366 = vpop.f32.mrf.mxu0
        %v1367 = vadd.f32 %v1302, %v1366
        %1368 = vmatmul.f32.gmra.mxu0 %v1050
        %v1369 = vpop.f32.mrf.mxu0
        %v1370 = vadd.f32 %v1305, %v1369
        %1371 = vmatmul.f32.gmra.mxu0 %v1052
        %v1372 = vpop.f32.mrf.mxu0
        %v1373 = vadd.f32 %v1308, %v1372
        %1374 = vmatmul.f32.gmra.mxu0 %v1055
        %v1375 = vpop.f32.mrf.mxu0
        %v1376 = vadd.f32 %v1311, %v1375
        %1377 = vmatmul.f32.gmra.mxu0 %v1057
        %v1378 = vpop.f32.mrf.mxu0
        %v1379 = vadd.f32 %v1314, %v1378
        %1380 = vmatmul.f32.gmra.mxu0 %v1060
        %v1381 = vpop.f32.mrf.mxu0
        %v1382 = vadd.f32 %v1317, %v1381
        %1383 = vmatmul.f32.gmra.mxu0 %v1062
        %v1384 = vpop.f32.mrf.mxu0
        %v1385 = vadd.f32 %v1320, %v1384
        %1386 = vmatmul.f32.gmra.mxu0 %v1065
        %v1387 = vpop.f32.mrf.mxu0
        %v1388 = vadd.f32 %v1323, %v1387
        %1389 = vmatmul.f32.gmra.mxu0 %v1067
        %v1390 = vpop.f32.mrf.mxu0
        %v1391 = vadd.f32 %v1326, %v1390
        %1392 = vdwg.mxu0
        %1393 = vst [vmem:[%s407] sm:$0xff] %v1216
        %1394 = vst [vmem:[%s407 + $0x8] sm:$0xff] %v1346
        %1395 = vst [vmem:[%s407 + $0x10] sm:$0xff] %v1219
        %1396 = vst [vmem:[%s407 + $0x18] sm:$0xff] %v1349
        %1397 = vst [vmem:[%s407 + $0x20] sm:$0xff] %v1222
        %1398 = vst [vmem:[%s407 + $0x28] sm:$0xff] %v1352
        %1399 = vst [vmem:[%s407 + $0x30] sm:$0xff] %v1225
        %1400 = vst [vmem:[%s407 + $0x38] sm:$0xff] %v1355
        %1401 = vst [vmem:[%s407 + $0x40] sm:$0xff] %v1228
        %1402 = vst [vmem:[%s407 + $0x48] sm:$0xff] %v1358
        %1403 = vst [vmem:[%s407 + $0x50] sm:$0xff] %v1231
        %1404 = vst [vmem:[%s407 + $0x58] sm:$0xff] %v1361
        %1405 = vst [vmem:[%s407 + $0x60] sm:$0xff] %v1234
        %1406 = vst [vmem:[%s407 + $0x68] sm:$0xff] %v1364
        %1407 = vst [vmem:[%s407 + $0x70] sm:$0xff] %v1237
        %1408 = vst [vmem:[%s407 + $0x78] sm:$0xff] %v1367
        %1409 = vst [vmem:[%s407 + $0x80] sm:$0xff] %v1240
        %1410 = vst [vmem:[%s407 + $0x88] sm:$0xff] %v1370
        %1411 = vst [vmem:[%s407 + $0x90] sm:$0xff] %v1243
        %1412 = vst [vmem:[%s407 + $0x98] sm:$0xff] %v1373
        %1413 = vst [vmem:[%s407 + $0xa0] sm:$0xff] %v1246
        %1414 = vst [vmem:[%s407 + $0xa8] sm:$0xff] %v1376
        %1415 = vst [vmem:[%s407 + $0xb0] sm:$0xff] %v1249
        %1416 = vst [vmem:[%s407 + $0xb8] sm:$0xff] %v1379
        %1417 = vst [vmem:[%s407 + $0xc0] sm:$0xff] %v1252
        %1418 = vst [vmem:[%s407 + $0xc8] sm:$0xff] %v1382
        %1419 = vst [vmem:[%s407 + $0xd0] sm:$0xff] %v1255
        %1420 = vst [vmem:[%s407 + $0xd8] sm:$0xff] %v1385
        %1421 = vst [vmem:[%s407 + $0xe0] sm:$0xff] %v1258
        %1422 = vst [vmem:[%s407 + $0xe8] sm:$0xff] %v1388
        %1423 = vst [vmem:[%s407 + $0xf0] sm:$0xff] %v1261
        %1424 = vst [vmem:[%s407 + $0xf8] sm:$0xff] %v1391
        %s1425 = sand.u32 %s209, 1
        %s1426 = scalar_lea.sflag [#allocation4], %s1425
        %s1427 = sand.u32 %s209, 1
        %s1428 = smul.addr %s1427, 256
        %s1429 = scalar_lea.vmem [#allocation13], %s1428
        // Predicated region
        $region77: #{tpu_custom_call.1} parent=51 // pred_check
          %p1430 = pneg %p219
        $region78: #{tpu_custom_call.1} parent=51 // pred_check_branch
          %1432 = sbr.rel (%p1430) target = $region80
        $region79: #{tpu_custom_call.1} parent=51 // pred_region
          %s1433 = smul.u32 16, %s28
          %1435 = vsyncadd %s1426, 0
          %s1436 = smul.addr %s1433, 2
          %s1437 = smul.addr %s1436, 8
          %s1438 = scalar_lea.hbm %s8, %s1437
          %s1439 = sshll.u32 %s1429, 4
          %s1440 = int_to_ptr.vmem [resolvable:$true] %s1439
          %s1441 = sshll.u32 %s1438, 4
          %s1442 = int_to_ptr.hbm [resolvable:$true] %s1441
          %1447 = dma.vmem_to_hbm [thread:$0]  %s1440, 4096, %s1442, %s1426, 256, 256, 16
        $region80: #{tpu_custom_call.1} parent=51 // pred_fallthru
          _
      $region52: #{tpu_custom_call.1} parent=5 // pred_fallthru
        _
      %p1448 = scmp.le.s32.totalorder 2, %s23
      // Predicated region
      $region81: #{tpu_custom_call.1} parent=5 // pred_check
        %p1449 = pneg %p1448
      $region82: #{tpu_custom_call.1} parent=5 // pred_check_branch
        %1451 = sbr.rel (%p1449) target = $region84
      $region83: #{tpu_custom_call.1} parent=5 // pred_region
        %s1452 = ssub.s32 %s23, 2
        // Predicated region
        $region85: #{tpu_custom_call.1} parent=83 // pred_check
          %p1453 = pneg %p225
        $region86: #{tpu_custom_call.1} parent=83 // pred_check_branch
          %1455 = sbr.rel (%p1453) target = $region88
        $region87: #{tpu_custom_call.1} parent=83 // pred_region
          %s1456 = sand.u32 %s210, 1
          %s1457 = scalar_lea.sflag [#allocation4], %s1456
          %s1458 = sand.u32 %s210, 1
          %s1459 = smul.addr %s1458, 256
          %s1460 = scalar_lea.vmem [#allocation13], %s1459
          %1462 = dma.done %s1457, 4096
        $region88: #{tpu_custom_call.1} parent=83 // pred_fallthru
          _
      $region84: #{tpu_custom_call.1} parent=5 // pred_fallthru
        _
    $region6: #{tpu_custom_call.1} parent=1 // loop_footer
      %s27 = sadd.s32 1, %s23
    $region7: #{tpu_custom_call.1} parent=1 // loop_footer_branch
      %22 = sbr.rel target = $region3
    $region8: #{tpu_custom_call.1} parent=1 // loop_exit
      _
    %1463 = vsyncpa [#allocation3], 1
    %s1464 = scalar_lea.sflag [#allocation3], 1
    %1465 = vsyncpa %s1464, 1
    %1466 = vsyncpa [#allocation6], 1
    %1467 = vsyncpa [#allocation9], 1
    %1468 = vsyncpa [#allocation12], 1
    %1469 = vsyncpa [#allocation4], 1
    %s1470 = scalar_lea.sflag [#allocation4], 1
    %1471 = vsyncpa %s1470, 1

</llo_original>
